<compile_context>
chip_gen: v7x
topology: tpu7x:2x2x1
jax: 0.10.0
libtpu: 0.0.40
codegen_flags: <defaults>
</compile_context>

<pallas_src>
import jax
import jax.numpy as jnp
from jax.experimental import pallas as pl
from jax.experimental.pallas import tpu as pltpu


# ----------------------------- config ---------------------------------------
class Config:
    EMBEDDING_DIM = 32
    HIDDEN_CHANNELS = 32
    NUM_GNN_LAYERS = 2
    DROPOUT = 0.1  # inference -> identity


# ----------------------------- fused kernel ----------------------------------
def make_fused_kernel(num_layers, T, H, N_u, N_c):
    """Build the single fused kernel for the whole forward pass."""

    def kernel(*refs):
        (xu_ref,      # (T*N_u, E)  user sequences, time-major flattened, f32
         xc_ref,      # (N_c, E)    content features, f32
         a_ref,       # (N, N)      row-normalized adjacency, bf16
         wih_ref,     # (E, 4H)     bf16, gate cols [i,f,o,g]
         whh_ref,     # (H, 4H)     bf16, gate cols [i,f,o,g]
         lstm_b_ref,  # (1, 4H)     f32, b_ih + b_hh, gate cols [i,f,o,g]
         cw_ref,      # (E, H)      bf16
         cb_ref,      # (1, H)      f32
         ) = refs[0:8]
        sage_refs = refs[8:8 + 3 * num_layers]  # per layer: Wl (H,H) bf16,
                                                #            Wr (H,H) bf16,
                                                #            b  (1,H) f32
        (w1u_ref,     # (H, H)   bf16  (classifier W1, user half)
         w1c_ref,     # (H, H)   bf16  (classifier W1, content half)
         b1_ref,      # (1, H)   f32
         w2_ref,      # (H, 128) bf16  (real weight in lane 0, zero-padded)
         b2_ref,      # (1, 128) f32   (real bias in lane 0)
         out_ref,     # (N_u, 128) f32
         ) = refs[8 + 3 * num_layers:]

        # ---------------- (1) LSTM user aggregator: last hidden state ----------
        # Hoisted input-to-hidden matmul: one (T*N_u,E)@(E,4H) bf16 MXU op + ONE
        # bias broadcast; the unrolled recurrence only does h @ Whh.
        gates_x = (jnp.dot(xu_ref[...].astype(jnp.bfloat16), wih_ref[...],
                           preferred_element_type=jnp.float32)
                   + lstm_b_ref[...])                       # (T*N_u, 4H) f32
        whh = whh_ref[...]                                  # bf16

        h = jnp.zeros((N_u, H), jnp.float32)
        c = jnp.zeros((N_u, H), jnp.float32)
        for t in range(T):  # T static & small -> unrolled
            gates = (gates_x[t * N_u:(t + 1) * N_u, :]
                     + jnp.dot(h.astype(jnp.bfloat16), whh,
                               preferred_element_type=jnp.float32))  # (N_u, 4H) f32
            # Gate cols are pre-ordered [i | f | o | g]: one sigmoid pass over the
            # full vreg covers i,f,o; one tanh pass covers g.  (Elementwise gate
            # math stays f32 — v5e VPU/EUP have no bf16.)
            sig_all = jax.nn.sigmoid(gates)                 # 1 EUP pass
            tanh_all = jnp.tanh(gates)                      # 1 EUP pass
            i = sig_all[:, 0 * H:1 * H]
            f = sig_all[:, 1 * H:2 * H]
            o = sig_all[:, 2 * H:3 * H]
            g = tanh_all[:, 3 * H:4 * H]
            c = f * c + i * g
            h = o * jnp.tanh(c)
        user_features = h                                   # (N_u, H) f32

        # ---------------- (2) content Linear -----------------------------------
        content_features = (jnp.dot(xc_ref[...].astype(jnp.bfloat16), cw_ref[...],
                                    preferred_element_type=jnp.float32)
                            + cb_ref[...])                  # (N_c, H) f32

        # ---------------- (3) SAGEConv stack (mean aggregation) ----------------
        # Sublane-axis concat (cheap, no lane relayout).
        h_nodes = jnp.concatenate([user_features, content_features], axis=0)  # (N, H)
        a_bf = a_ref[...]                                   # bf16 adjacency
        for l in range(num_layers):
            wl_ref, wr_ref, bl_ref = sage_refs[3 * l:3 * l + 3]
            h_bf = h_nodes.astype(jnp.bfloat16)
            aggr = jnp.dot(a_bf, h_bf,
                           preferred_element_type=jnp.float32)          # (N, H)
            # out = lin_l(mean_nbrs) + lin_r(x): two small matmuls summed —
            # no runtime lane concat.
            y = (jnp.dot(aggr.astype(jnp.bfloat16), wl_ref[...],
                         preferred_element_type=jnp.float32)
                 + jnp.dot(h_bf, wr_ref[...],
                           preferred_element_type=jnp.float32)
                 + bl_ref[...])
            h_nodes = jnp.maximum(y, 0.0)                   # fused relu

        # ---------------- (4) classifier ----------------------------------------
        # Lin(2H->H) on cat([user, content], dim=1) == h_u@W1u + h_c@W1c + b1
        # (sublane slices only, no lane concat).
        h_u = h_nodes[:N_u, :].astype(jnp.bfloat16)
        h_c = h_nodes[N_u:, :].astype(jnp.bfloat16)
        hid = (jnp.dot(h_u, w1u_ref[...], preferred_element_type=jnp.float32)
               + jnp.dot(h_c, w1c_ref[...], preferred_element_type=jnp.float32)
               + b1_ref[...])
        hid = jnp.maximum(hid, 0.0)
        # Dropout = identity at inference.
        logits = (jnp.dot(hid.astype(jnp.bfloat16), w2_ref[...],
                          preferred_element_type=jnp.float32)
                  + b2_ref[...])                            # (N_u, 128) lane-dense
        out_ref[...] = jax.nn.sigmoid(logits)

    return kernel


# -------------------------- pallas_call helper -------------------------------
def _blk(shape):
    n = len(shape)
    return pl.BlockSpec(shape, lambda i, n=n: (0,) * n)


# ----------------------------- parameters ------------------------------------
def init_params(key, cfg):
    """PyTorch-convention shapes / initialization."""
    E, H, L = cfg.EMBEDDING_DIM, cfg.HIDDEN_CHANNELS, cfg.NUM_GNN_LAYERS
    keys = iter(jax.random.split(key, 12 + 3 * L))

    def u(shape, fan_in):
        bnd = 1.0 / (fan_in ** 0.5)
        return jax.random.uniform(next(keys), shape, jnp.float32, -bnd, bnd)

    p = {}
    # nn.LSTM(E, H, batch_first=True)  (torch gate row order: i, f, g, o)
    p["lstm_w_ih"] = u((4 * H, E), H)
    p["lstm_w_hh"] = u((4 * H, H), H)
    p["lstm_b_ih"] = u((4 * H,), H)
    p["lstm_b_hh"] = u((4 * H,), H)
    # nn.Linear(E, H)
    p["content_w"] = u((H, E), E)
    p["content_b"] = u((H,), E)
    # SAGEConv layers (lin_l has bias, lin_r has none — PyG convention)
    for i in range(L):
        p[f"sage{i}_w_l"] = u((H, H), H)
        p[f"sage{i}_b_l"] = u((H,), H)
        p[f"sage{i}_w_r"] = u((H, H), H)
    # classifier
    p["cls_w1"] = u((H, 2 * H), 2 * H)
    p["cls_b1"] = u((H,), 2 * H)
    p["cls_w2"] = u((1, H), H)
    p["cls_b2"] = u((1,), H)
    return p


def _reorder_gates(x, H):
    """torch gate order [i, f, g, o] along axis 0 -> kernel order [i, f, o, g]."""
    return jnp.concatenate([x[0:2 * H], x[3 * H:4 * H], x[2 * H:3 * H]], axis=0)


def prepare_kernel_params(p, cfg):
    """One-time prep: pre-transpose to (in,out) layout, fuse + reorder LSTM gate
    biases/weights to [i,f,o,g], keep SAGE lin_l / lin_r and classifier W1
    halves separate (no runtime lane concat), pad classifier head to 128 lanes,
    downcast all MXU weight operands to bf16 (biases stay f32)."""
    H = cfg.HIDDEN_CHANNELS
    kp = {}
    kp["wih"] = _reorder_gates(p["lstm_w_ih"], H).T.astype(jnp.bfloat16)   # (E, 4H)
    kp["whh"] = _reorder_gates(p["lstm_w_hh"], H).T.astype(jnp.bfloat16)   # (H, 4H)
    kp["lstm_b"] = _reorder_gates(p["lstm_b_ih"] + p["lstm_b_hh"], H).reshape(1, -1)
    kp["cw"] = p["content_w"].T.astype(jnp.bfloat16)                       # (E, H)
    kp["cb"] = p["content_b"].reshape(1, -1)
    for i in range(cfg.NUM_GNN_LAYERS):
        kp[f"sage{i}_wl"] = p[f"sage{i}_w_l"].T.astype(jnp.bfloat16)       # (H, H)
        kp[f"sage{i}_wr"] = p[f"sage{i}_w_r"].T.astype(jnp.bfloat16)       # (H, H)
        kp[f"sage{i}_bl"] = p[f"sage{i}_b_l"].reshape(1, -1)
    w1t = p["cls_w1"].T                                                    # (2H, H)
    kp["cls_w1u"] = w1t[:H, :].astype(jnp.bfloat16)                        # (H, H)
    kp["cls_w1c"] = w1t[H:, :].astype(jnp.bfloat16)                        # (H, H)
    kp["cls_b1"] = p["cls_b1"].reshape(1, -1)
    kp["cls_w2"] = jnp.pad(p["cls_w2"].T, ((0, 0), (0, 127))).astype(jnp.bfloat16)
    kp["cls_b2"] = jnp.pad(p["cls_b2"].reshape(1, -1), ((0, 0), (0, 127)))
    return kp


# ----------------------------- forward ---------------------------------------
def gnn_recommender_forward(kp, x_user, x_content, edge_index):
    N_u, T, E = x_user.shape
    N_c = x_content.shape[0]
    H = kp["cw"].shape[1]
    num_layers = sum(1 for k in kp if k.startswith("sage") and k.endswith("_wl"))
    N = N_u + N_c
    assert N_u == N_c, "final concat(user, content, axis=1) requires N_users == N_content"
    assert N_u % 8 == 0, "keep N_u a multiple of 8 for sublane-aligned timestep slices"

    # Jitted JAX glue: dense row-normalized adjacency (PyG mean aggregation;
    # duplicate edges counted, matching scatter-add + degree normalization).
    src, dst = edge_index[0], edge_index[1]
    A = jnp.zeros((N, N), jnp.float32).at[dst, src].add(1.0)
    deg = A.sum(axis=1, keepdims=True)
    A = jnp.where(deg > 0, A / jnp.maximum(deg, 1.0), 0.0).astype(jnp.bfloat16)

    # time-major flatten so each timestep is a contiguous sublane slice in-kernel
    x_user_flat = jnp.transpose(x_user, (1, 0, 2)).reshape(T * N_u, E)

    args = [x_user_flat, x_content, A,
            kp["wih"], kp["whh"], kp["lstm_b"], kp["cw"], kp["cb"]]
    for i in range(num_layers):
        args += [kp[f"sage{i}_wl"], kp[f"sage{i}_wr"], kp[f"sage{i}_bl"]]
    args += [kp["cls_w1u"], kp["cls_w1c"], kp["cls_b1"], kp["cls_w2"], kp["cls_b2"]]

    kernel = make_fused_kernel(num_layers=num_layers, T=T, H=H, N_u=N_u, N_c=N_c)
    out_shape = jax.ShapeDtypeStruct((N_u, 128), jnp.float32)

    out = pl.pallas_call(
        kernel,
        out_shape=out_shape,
        grid=(1,),
        in_specs=[_blk(a.shape) for a in args],
        out_specs=_blk(out_shape.shape),
        compiler_params=pltpu.CompilerParams(
            dimension_semantics=("arbitrary",)),
    )(*args)

    return out[:, :1]   # lane-dense kernel output -> (N_u, 1)


# ------------------------------- main -----------------------------------------
if __name__ == "__main__":
    cfg = Config()
    key = jax.random.PRNGKey(0)
    kp_, kx, kc, ke1, ke2 = jax.random.split(key, 5)

    params = init_params(kp_, cfg)
    kparams = prepare_kernel_params(params, cfg)

    N_users, N_content, seq_len, n_edges = 8, 8, 8, 24
    x_user = jax.random.normal(kx, (N_users, seq_len, cfg.EMBEDDING_DIM), jnp.float32)
    x_content = jax.random.normal(kc, (N_content, cfg.EMBEDDING_DIM), jnp.float32)
    N = N_users + N_content
    src = jax.random.randint(ke1, (n_edges,), 0, N)
    dst = jax.random.randint(ke2, (n_edges,), 0, N)
    edge_index = jnp.stack([src, dst]).astype(jnp.int32)

    forward = jax.jit(gnn_recommender_forward)
    out = forward(kparams, x_user, x_content, edge_index)
    out = jax.block_until_ready(out)

    assert out.shape == (N_users, 1)
    assert bool(jnp.all((out >= 0.0) & (out <= 1.0)))
    assert bool(jnp.all(jnp.isfinite(out)))
    print("KERNEL_OK")
</pallas_src>

<mosaic_0001>
module attributes {stable_mosaic.version = 11 : i64} {
  func.func @kernel(%arg0: i32, %arg1: memref<64x32xf32, #tpu.memory_space<vmem>>, %arg2: memref<8x32xf32, #tpu.memory_space<vmem>>, %arg3: memref<16x16xbf16, #tpu.memory_space<vmem>>, %arg4: memref<32x128xbf16, #tpu.memory_space<vmem>>, %arg5: memref<32x128xbf16, #tpu.memory_space<vmem>>, %arg6: memref<1x128xf32, #tpu.memory_space<vmem>>, %arg7: memref<32x32xbf16, #tpu.memory_space<vmem>>, %arg8: memref<1x32xf32, #tpu.memory_space<vmem>>, %arg9: memref<32x32xbf16, #tpu.memory_space<vmem>>, %arg10: memref<32x32xbf16, #tpu.memory_space<vmem>>, %arg11: memref<1x32xf32, #tpu.memory_space<vmem>>, %arg12: memref<32x32xbf16, #tpu.memory_space<vmem>>, %arg13: memref<32x32xbf16, #tpu.memory_space<vmem>>, %arg14: memref<1x32xf32, #tpu.memory_space<vmem>>, %arg15: memref<32x32xbf16, #tpu.memory_space<vmem>>, %arg16: memref<32x32xbf16, #tpu.memory_space<vmem>>, %arg17: memref<1x32xf32, #tpu.memory_space<vmem>>, %arg18: memref<32x128xbf16, #tpu.memory_space<vmem>>, %arg19: memref<1x128xf32, #tpu.memory_space<vmem>>, %arg20: memref<8x128xf32, #tpu.memory_space<vmem>>) attributes {dimension_semantics = [#tpu.dimension_semantics<arbitrary>], iteration_bounds = array<i64: 1>, scalar_prefetch = 0 : i64, scratch_operands = 0 : i64, tpu.core_type = #tpu.core_type<tc>, window_params = [{pipeline_mode = #tpu.pipeline_mode<synchronous>, transform_indices = @transform_0, window_bounds = array<i64: 64, 32>}, {pipeline_mode = #tpu.pipeline_mode<synchronous>, transform_indices = @transform_1, window_bounds = array<i64: 8, 32>}, {pipeline_mode = #tpu.pipeline_mode<synchronous>, transform_indices = @transform_2, window_bounds = array<i64: 16, 16>}, {pipeline_mode = #tpu.pipeline_mode<synchronous>, transform_indices = @transform_3, window_bounds = array<i64: 32, 128>}, {pipeline_mode = #tpu.pipeline_mode<synchronous>, transform_indices = @transform_4, window_bounds = array<i64: 32, 128>}, {pipeline_mode = #tpu.pipeline_mode<synchronous>, transform_indices = @transform_5, window_bounds = array<i64: 1, 128>}, {pipeline_mode = #tpu.pipeline_mode<synchronous>, transform_indices = @transform_6, window_bounds = array<i64: 32, 32>}, {pipeline_mode = #tpu.pipeline_mode<synchronous>, transform_indices = @transform_7, window_bounds = array<i64: 1, 32>}, {pipeline_mode = #tpu.pipeline_mode<synchronous>, transform_indices = @transform_8, window_bounds = array<i64: 32, 32>}, {pipeline_mode = #tpu.pipeline_mode<synchronous>, transform_indices = @transform_9, window_bounds = array<i64: 32, 32>}, {pipeline_mode = #tpu.pipeline_mode<synchronous>, transform_indices = @transform_10, window_bounds = array<i64: 1, 32>}, {pipeline_mode = #tpu.pipeline_mode<synchronous>, transform_indices = @transform_11, window_bounds = array<i64: 32, 32>}, {pipeline_mode = #tpu.pipeline_mode<synchronous>, transform_indices = @transform_12, window_bounds = array<i64: 32, 32>}, {pipeline_mode = #tpu.pipeline_mode<synchronous>, transform_indices = @transform_13, window_bounds = array<i64: 1, 32>}, {pipeline_mode = #tpu.pipeline_mode<synchronous>, transform_indices = @transform_14, window_bounds = array<i64: 32, 32>}, {pipeline_mode = #tpu.pipeline_mode<synchronous>, transform_indices = @transform_15, window_bounds = array<i64: 32, 32>}, {pipeline_mode = #tpu.pipeline_mode<synchronous>, transform_indices = @transform_16, window_bounds = array<i64: 1, 32>}, {pipeline_mode = #tpu.pipeline_mode<synchronous>, transform_indices = @transform_17, window_bounds = array<i64: 32, 128>}, {pipeline_mode = #tpu.pipeline_mode<synchronous>, transform_indices = @transform_18, window_bounds = array<i64: 1, 128>}, {pipeline_mode = #tpu.pipeline_mode<synchronous>, transform_indices = @transform_19, window_bounds = array<i64: 8, 128>}]} {
    %c0 = arith.constant 0 : index
    %c0_0 = arith.constant 0 : index
    %0 = vector.load %arg1[%c0, %c0_0] : memref<64x32xf32, #tpu.memory_space<vmem>>, vector<64x32xf32>
    %1 = arith.truncf %0 : vector<64x32xf32> to vector<64x32xbf16>
    %c0_1 = arith.constant 0 : index
    %c0_2 = arith.constant 0 : index
    %2 = vector.load %arg4[%c0_1, %c0_2] : memref<32x128xbf16, #tpu.memory_space<vmem>>, vector<32x128xbf16>
    %cst = arith.constant dense<0.000000e+00> : vector<64x128xf32>
    %3 = tpu.matmul %1, %2, %cst {dimension_numbers = #tpu.dot_dimension_numbers<[1], [0], [0], [1], [0, 0, 1, 1], [], []>} : vector<64x32xbf16>, vector<32x128xbf16>, vector<64x128xf32> -> vector<64x128xf32>
    %c0_3 = arith.constant 0 : index
    %c0_4 = arith.constant 0 : index
    %4 = vector.load %arg6[%c0_3, %c0_4] : memref<1x128xf32, #tpu.memory_space<vmem>>, vector<1x128xf32>
    %5 = vector.broadcast %4 : vector<1x128xf32> to vector<64x128xf32>
    %6 = arith.addf %3, %5 : vector<64x128xf32>
    %c0_5 = arith.constant 0 : index
    %c0_6 = arith.constant 0 : index
    %7 = vector.load %arg5[%c0_5, %c0_6] : memref<32x128xbf16, #tpu.memory_space<vmem>>, vector<32x128xbf16>
    %cst_7 = arith.constant 0.000000e+00 : f32
    %8 = vector.broadcast %cst_7 : f32 to vector<8x32xf32>
    %cst_8 = arith.constant 0.000000e+00 : f32
    %9 = vector.broadcast %cst_8 : f32 to vector<8x32xf32>
    %10 = vector.extract_strided_slice %6 {offsets = [0, 0], sizes = [8, 128], strides = [1, 1]} : vector<64x128xf32> to vector<8x128xf32>
    %11 = arith.truncf %8 : vector<8x32xf32> to vector<8x32xbf16>
    %cst_9 = arith.constant dense<0.000000e+00> : vector<8x128xf32>
    %12 = tpu.matmul %11, %7, %cst_9 {dimension_numbers = #tpu.dot_dimension_numbers<[1], [0], [0], [1], [0, 0, 1, 1], [], []>} : vector<8x32xbf16>, vector<32x128xbf16>, vector<8x128xf32> -> vector<8x128xf32>
    %13 = arith.addf %10, %12 : vector<8x128xf32>
    %14 = arith.negf %13 : vector<8x128xf32>
    %15 = math.exp %14 : vector<8x128xf32>
    %cst_10 = arith.constant 1.000000e+00 : f32
    %16 = vector.broadcast %cst_10 : f32 to vector<8x128xf32>
    %17 = arith.addf %16, %15 : vector<8x128xf32>
    %18 = arith.divf %16, %17 : vector<8x128xf32>
    %19 = math.tanh %13 : vector<8x128xf32>
    %20 = vector.extract_strided_slice %18 {offsets = [0, 0], sizes = [8, 32], strides = [1, 1]} : vector<8x128xf32> to vector<8x32xf32>
    %21 = vector.extract_strided_slice %18 {offsets = [0, 32], sizes = [8, 32], strides = [1, 1]} : vector<8x128xf32> to vector<8x32xf32>
    %22 = vector.extract_strided_slice %18 {offsets = [0, 64], sizes = [8, 32], strides = [1, 1]} : vector<8x128xf32> to vector<8x32xf32>
    %23 = vector.extract_strided_slice %19 {offsets = [0, 96], sizes = [8, 32], strides = [1, 1]} : vector<8x128xf32> to vector<8x32xf32>
    %24 = arith.mulf %21, %9 : vector<8x32xf32>
    %25 = arith.mulf %20, %23 : vector<8x32xf32>
    %26 = arith.addf %24, %25 : vector<8x32xf32>
    %27 = math.tanh %26 : vector<8x32xf32>
    %28 = arith.mulf %22, %27 : vector<8x32xf32>
    %29 = vector.extract_strided_slice %6 {offsets = [8, 0], sizes = [8, 128], strides = [1, 1]} : vector<64x128xf32> to vector<8x128xf32>
    %30 = arith.truncf %28 : vector<8x32xf32> to vector<8x32xbf16>
    %cst_11 = arith.constant dense<0.000000e+00> : vector<8x128xf32>
    %31 = tpu.matmul %30, %7, %cst_11 {dimension_numbers = #tpu.dot_dimension_numbers<[1], [0], [0], [1], [0, 0, 1, 1], [], []>} : vector<8x32xbf16>, vector<32x128xbf16>, vector<8x128xf32> -> vector<8x128xf32>
    %32 = arith.addf %29, %31 : vector<8x128xf32>
    %33 = arith.negf %32 : vector<8x128xf32>
    %34 = math.exp %33 : vector<8x128xf32>
    %cst_12 = arith.constant 1.000000e+00 : f32
    %35 = vector.broadcast %cst_12 : f32 to vector<8x128xf32>
    %36 = arith.addf %35, %34 : vector<8x128xf32>
    %37 = arith.divf %35, %36 : vector<8x128xf32>
    %38 = math.tanh %32 : vector<8x128xf32>
    %39 = vector.extract_strided_slice %37 {offsets = [0, 0], sizes = [8, 32], strides = [1, 1]} : vector<8x128xf32> to vector<8x32xf32>
    %40 = vector.extract_strided_slice %37 {offsets = [0, 32], sizes = [8, 32], strides = [1, 1]} : vector<8x128xf32> to vector<8x32xf32>
    %41 = vector.extract_strided_slice %37 {offsets = [0, 64], sizes = [8, 32], strides = [1, 1]} : vector<8x128xf32> to vector<8x32xf32>
    %42 = vector.extract_strided_slice %38 {offsets = [0, 96], sizes = [8, 32], strides = [1, 1]} : vector<8x128xf32> to vector<8x32xf32>
    %43 = arith.mulf %40, %26 : vector<8x32xf32>
    %44 = arith.mulf %39, %42 : vector<8x32xf32>
    %45 = arith.addf %43, %44 : vector<8x32xf32>
    %46 = math.tanh %45 : vector<8x32xf32>
    %47 = arith.mulf %41, %46 : vector<8x32xf32>
    %48 = vector.extract_strided_slice %6 {offsets = [16, 0], sizes = [8, 128], strides = [1, 1]} : vector<64x128xf32> to vector<8x128xf32>
    %49 = arith.truncf %47 : vector<8x32xf32> to vector<8x32xbf16>
    %cst_13 = arith.constant dense<0.000000e+00> : vector<8x128xf32>
    %50 = tpu.matmul %49, %7, %cst_13 {dimension_numbers = #tpu.dot_dimension_numbers<[1], [0], [0], [1], [0, 0, 1, 1], [], []>} : vector<8x32xbf16>, vector<32x128xbf16>, vector<8x128xf32> -> vector<8x128xf32>
    %51 = arith.addf %48, %50 : vector<8x128xf32>
    %52 = arith.negf %51 : vector<8x128xf32>
    %53 = math.exp %52 : vector<8x128xf32>
    %cst_14 = arith.constant 1.000000e+00 : f32
    %54 = vector.broadcast %cst_14 : f32 to vector<8x128xf32>
    %55 = arith.addf %54, %53 : vector<8x128xf32>
    %56 = arith.divf %54, %55 : vector<8x128xf32>
    %57 = math.tanh %51 : vector<8x128xf32>
    %58 = vector.extract_strided_slice %56 {offsets = [0, 0], sizes = [8, 32], strides = [1, 1]} : vector<8x128xf32> to vector<8x32xf32>
    %59 = vector.extract_strided_slice %56 {offsets = [0, 32], sizes = [8, 32], strides = [1, 1]} : vector<8x128xf32> to vector<8x32xf32>
    %60 = vector.extract_strided_slice %56 {offsets = [0, 64], sizes = [8, 32], strides = [1, 1]} : vector<8x128xf32> to vector<8x32xf32>
    %61 = vector.extract_strided_slice %57 {offsets = [0, 96], sizes = [8, 32], strides = [1, 1]} : vector<8x128xf32> to vector<8x32xf32>
    %62 = arith.mulf %59, %45 : vector<8x32xf32>
    %63 = arith.mulf %58, %61 : vector<8x32xf32>
    %64 = arith.addf %62, %63 : vector<8x32xf32>
    %65 = math.tanh %64 : vector<8x32xf32>
    %66 = arith.mulf %60, %65 : vector<8x32xf32>
    %67 = vector.extract_strided_slice %6 {offsets = [24, 0], sizes = [8, 128], strides = [1, 1]} : vector<64x128xf32> to vector<8x128xf32>
    %68 = arith.truncf %66 : vector<8x32xf32> to vector<8x32xbf16>
    %cst_15 = arith.constant dense<0.000000e+00> : vector<8x128xf32>
    %69 = tpu.matmul %68, %7, %cst_15 {dimension_numbers = #tpu.dot_dimension_numbers<[1], [0], [0], [1], [0, 0, 1, 1], [], []>} : vector<8x32xbf16>, vector<32x128xbf16>, vector<8x128xf32> -> vector<8x128xf32>
    %70 = arith.addf %67, %69 : vector<8x128xf32>
    %71 = arith.negf %70 : vector<8x128xf32>
    %72 = math.exp %71 : vector<8x128xf32>
    %cst_16 = arith.constant 1.000000e+00 : f32
    %73 = vector.broadcast %cst_16 : f32 to vector<8x128xf32>
    %74 = arith.addf %73, %72 : vector<8x128xf32>
    %75 = arith.divf %73, %74 : vector<8x128xf32>
    %76 = math.tanh %70 : vector<8x128xf32>
    %77 = vector.extract_strided_slice %75 {offsets = [0, 0], sizes = [8, 32], strides = [1, 1]} : vector<8x128xf32> to vector<8x32xf32>
    %78 = vector.extract_strided_slice %75 {offsets = [0, 32], sizes = [8, 32], strides = [1, 1]} : vector<8x128xf32> to vector<8x32xf32>
    %79 = vector.extract_strided_slice %75 {offsets = [0, 64], sizes = [8, 32], strides = [1, 1]} : vector<8x128xf32> to vector<8x32xf32>
    %80 = vector.extract_strided_slice %76 {offsets = [0, 96], sizes = [8, 32], strides = [1, 1]} : vector<8x128xf32> to vector<8x32xf32>
    %81 = arith.mulf %78, %64 : vector<8x32xf32>
    %82 = arith.mulf %77, %80 : vector<8x32xf32>
    %83 = arith.addf %81, %82 : vector<8x32xf32>
    %84 = math.tanh %83 : vector<8x32xf32>
    %85 = arith.mulf %79, %84 : vector<8x32xf32>
    %86 = vector.extract_strided_slice %6 {offsets = [32, 0], sizes = [8, 128], strides = [1, 1]} : vector<64x128xf32> to vector<8x128xf32>
    %87 = arith.truncf %85 : vector<8x32xf32> to vector<8x32xbf16>
    %cst_17 = arith.constant dense<0.000000e+00> : vector<8x128xf32>
    %88 = tpu.matmul %87, %7, %cst_17 {dimension_numbers = #tpu.dot_dimension_numbers<[1], [0], [0], [1], [0, 0, 1, 1], [], []>} : vector<8x32xbf16>, vector<32x128xbf16>, vector<8x128xf32> -> vector<8x128xf32>
    %89 = arith.addf %86, %88 : vector<8x128xf32>
    %90 = arith.negf %89 : vector<8x128xf32>
    %91 = math.exp %90 : vector<8x128xf32>
    %cst_18 = arith.constant 1.000000e+00 : f32
    %92 = vector.broadcast %cst_18 : f32 to vector<8x128xf32>
    %93 = arith.addf %92, %91 : vector<8x128xf32>
    %94 = arith.divf %92, %93 : vector<8x128xf32>
    %95 = math.tanh %89 : vector<8x128xf32>
    %96 = vector.extract_strided_slice %94 {offsets = [0, 0], sizes = [8, 32], strides = [1, 1]} : vector<8x128xf32> to vector<8x32xf32>
    %97 = vector.extract_strided_slice %94 {offsets = [0, 32], sizes = [8, 32], strides = [1, 1]} : vector<8x128xf32> to vector<8x32xf32>
    %98 = vector.extract_strided_slice %94 {offsets = [0, 64], sizes = [8, 32], strides = [1, 1]} : vector<8x128xf32> to vector<8x32xf32>
    %99 = vector.extract_strided_slice %95 {offsets = [0, 96], sizes = [8, 32], strides = [1, 1]} : vector<8x128xf32> to vector<8x32xf32>
    %100 = arith.mulf %97, %83 : vector<8x32xf32>
    %101 = arith.mulf %96, %99 : vector<8x32xf32>
    %102 = arith.addf %100, %101 : vector<8x32xf32>
    %103 = math.tanh %102 : vector<8x32xf32>
    %104 = arith.mulf %98, %103 : vector<8x32xf32>
    %105 = vector.extract_strided_slice %6 {offsets = [40, 0], sizes = [8, 128], strides = [1, 1]} : vector<64x128xf32> to vector<8x128xf32>
    %106 = arith.truncf %104 : vector<8x32xf32> to vector<8x32xbf16>
    %cst_19 = arith.constant dense<0.000000e+00> : vector<8x128xf32>
    %107 = tpu.matmul %106, %7, %cst_19 {dimension_numbers = #tpu.dot_dimension_numbers<[1], [0], [0], [1], [0, 0, 1, 1], [], []>} : vector<8x32xbf16>, vector<32x128xbf16>, vector<8x128xf32> -> vector<8x128xf32>
    %108 = arith.addf %105, %107 : vector<8x128xf32>
    %109 = arith.negf %108 : vector<8x128xf32>
    %110 = math.exp %109 : vector<8x128xf32>
    %cst_20 = arith.constant 1.000000e+00 : f32
    %111 = vector.broadcast %cst_20 : f32 to vector<8x128xf32>
    %112 = arith.addf %111, %110 : vector<8x128xf32>
    %113 = arith.divf %111, %112 : vector<8x128xf32>
    %114 = math.tanh %108 : vector<8x128xf32>
    %115 = vector.extract_strided_slice %113 {offsets = [0, 0], sizes = [8, 32], strides = [1, 1]} : vector<8x128xf32> to vector<8x32xf32>
    %116 = vector.extract_strided_slice %113 {offsets = [0, 32], sizes = [8, 32], strides = [1, 1]} : vector<8x128xf32> to vector<8x32xf32>
    %117 = vector.extract_strided_slice %113 {offsets = [0, 64], sizes = [8, 32], strides = [1, 1]} : vector<8x128xf32> to vector<8x32xf32>
    %118 = vector.extract_strided_slice %114 {offsets = [0, 96], sizes = [8, 32], strides = [1, 1]} : vector<8x128xf32> to vector<8x32xf32>
    %119 = arith.mulf %116, %102 : vector<8x32xf32>
    %120 = arith.mulf %115, %118 : vector<8x32xf32>
    %121 = arith.addf %119, %120 : vector<8x32xf32>
    %122 = math.tanh %121 : vector<8x32xf32>
    %123 = arith.mulf %117, %122 : vector<8x32xf32>
    %124 = vector.extract_strided_slice %6 {offsets = [48, 0], sizes = [8, 128], strides = [1, 1]} : vector<64x128xf32> to vector<8x128xf32>
    %125 = arith.truncf %123 : vector<8x32xf32> to vector<8x32xbf16>
    %cst_21 = arith.constant dense<0.000000e+00> : vector<8x128xf32>
    %126 = tpu.matmul %125, %7, %cst_21 {dimension_numbers = #tpu.dot_dimension_numbers<[1], [0], [0], [1], [0, 0, 1, 1], [], []>} : vector<8x32xbf16>, vector<32x128xbf16>, vector<8x128xf32> -> vector<8x128xf32>
    %127 = arith.addf %124, %126 : vector<8x128xf32>
    %128 = arith.negf %127 : vector<8x128xf32>
    %129 = math.exp %128 : vector<8x128xf32>
    %cst_22 = arith.constant 1.000000e+00 : f32
    %130 = vector.broadcast %cst_22 : f32 to vector<8x128xf32>
    %131 = arith.addf %130, %129 : vector<8x128xf32>
    %132 = arith.divf %130, %131 : vector<8x128xf32>
    %133 = math.tanh %127 : vector<8x128xf32>
    %134 = vector.extract_strided_slice %132 {offsets = [0, 0], sizes = [8, 32], strides = [1, 1]} : vector<8x128xf32> to vector<8x32xf32>
    %135 = vector.extract_strided_slice %132 {offsets = [0, 32], sizes = [8, 32], strides = [1, 1]} : vector<8x128xf32> to vector<8x32xf32>
    %136 = vector.extract_strided_slice %132 {offsets = [0, 64], sizes = [8, 32], strides = [1, 1]} : vector<8x128xf32> to vector<8x32xf32>
    %137 = vector.extract_strided_slice %133 {offsets = [0, 96], sizes = [8, 32], strides = [1, 1]} : vector<8x128xf32> to vector<8x32xf32>
    %138 = arith.mulf %135, %121 : vector<8x32xf32>
    %139 = arith.mulf %134, %137 : vector<8x32xf32>
    %140 = arith.addf %138, %139 : vector<8x32xf32>
    %141 = math.tanh %140 : vector<8x32xf32>
    %142 = arith.mulf %136, %141 : vector<8x32xf32>
    %143 = vector.extract_strided_slice %6 {offsets = [56, 0], sizes = [8, 128], strides = [1, 1]} : vector<64x128xf32> to vector<8x128xf32>
    %144 = arith.truncf %142 : vector<8x32xf32> to vector<8x32xbf16>
    %cst_23 = arith.constant dense<0.000000e+00> : vector<8x128xf32>
    %145 = tpu.matmul %144, %7, %cst_23 {dimension_numbers = #tpu.dot_dimension_numbers<[1], [0], [0], [1], [0, 0, 1, 1], [], []>} : vector<8x32xbf16>, vector<32x128xbf16>, vector<8x128xf32> -> vector<8x128xf32>
    %146 = arith.addf %143, %145 : vector<8x128xf32>
    %147 = arith.negf %146 : vector<8x128xf32>
    %148 = math.exp %147 : vector<8x128xf32>
    %cst_24 = arith.constant 1.000000e+00 : f32
    %149 = vector.broadcast %cst_24 : f32 to vector<8x128xf32>
    %150 = arith.addf %149, %148 : vector<8x128xf32>
    %151 = arith.divf %149, %150 : vector<8x128xf32>
    %152 = math.tanh %146 : vector<8x128xf32>
    %153 = vector.extract_strided_slice %151 {offsets = [0, 0], sizes = [8, 32], strides = [1, 1]} : vector<8x128xf32> to vector<8x32xf32>
    %154 = vector.extract_strided_slice %151 {offsets = [0, 32], sizes = [8, 32], strides = [1, 1]} : vector<8x128xf32> to vector<8x32xf32>
    %155 = vector.extract_strided_slice %151 {offsets = [0, 64], sizes = [8, 32], strides = [1, 1]} : vector<8x128xf32> to vector<8x32xf32>
    %156 = vector.extract_strided_slice %152 {offsets = [0, 96], sizes = [8, 32], strides = [1, 1]} : vector<8x128xf32> to vector<8x32xf32>
    %157 = arith.mulf %154, %140 : vector<8x32xf32>
    %158 = arith.mulf %153, %156 : vector<8x32xf32>
    %159 = arith.addf %157, %158 : vector<8x32xf32>
    %160 = math.tanh %159 : vector<8x32xf32>
    %161 = arith.mulf %155, %160 : vector<8x32xf32>
    %c0_25 = arith.constant 0 : index
    %c0_26 = arith.constant 0 : index
    %162 = vector.load %arg2[%c0_25, %c0_26] : memref<8x32xf32, #tpu.memory_space<vmem>>, vector<8x32xf32>
    %163 = arith.truncf %162 : vector<8x32xf32> to vector<8x32xbf16>
    %c0_27 = arith.constant 0 : index
    %c0_28 = arith.constant 0 : index
    %164 = vector.load %arg7[%c0_27, %c0_28] : memref<32x32xbf16, #tpu.memory_space<vmem>>, vector<32x32xbf16>
    %cst_29 = arith.constant dense<0.000000e+00> : vector<8x32xf32>
    %165 = tpu.matmul %163, %164, %cst_29 {dimension_numbers = #tpu.dot_dimension_numbers<[1], [0], [0], [1], [0, 0, 1, 1], [], []>} : vector<8x32xbf16>, vector<32x32xbf16>, vector<8x32xf32> -> vector<8x32xf32>
    %c0_30 = arith.constant 0 : index
    %c0_31 = arith.constant 0 : index
    %166 = vector.load %arg8[%c0_30, %c0_31] : memref<1x32xf32, #tpu.memory_space<vmem>>, vector<1x32xf32>
    %167 = vector.broadcast %166 : vector<1x32xf32> to vector<8x32xf32>
    %168 = arith.addf %165, %167 : vector<8x32xf32>
    %169 = tpu.concatenate %161, %168 in 0 : vector<8x32xf32>, vector<8x32xf32> -> vector<16x32xf32>
    %c0_32 = arith.constant 0 : index
    %c0_33 = arith.constant 0 : index
    %170 = vector.load %arg3[%c0_32, %c0_33] : memref<16x16xbf16, #tpu.memory_space<vmem>>, vector<16x16xbf16>
    %171 = arith.truncf %169 : vector<16x32xf32> to vector<16x32xbf16>
    %cst_34 = arith.constant dense<0.000000e+00> : vector<16x32xf32>
    %172 = tpu.matmul %170, %171, %cst_34 {dimension_numbers = #tpu.dot_dimension_numbers<[1], [0], [0], [1], [0, 0, 1, 1], [], []>} : vector<16x16xbf16>, vector<16x32xbf16>, vector<16x32xf32> -> vector<16x32xf32>
    %173 = arith.truncf %172 : vector<16x32xf32> to vector<16x32xbf16>
    %c0_35 = arith.constant 0 : index
    %c0_36 = arith.constant 0 : index
    %174 = vector.load %arg9[%c0_35, %c0_36] : memref<32x32xbf16, #tpu.memory_space<vmem>>, vector<32x32xbf16>
    %cst_37 = arith.constant dense<0.000000e+00> : vector<16x32xf32>
    %175 = tpu.matmul %173, %174, %cst_37 {dimension_numbers = #tpu.dot_dimension_numbers<[1], [0], [0], [1], [0, 0, 1, 1], [], []>} : vector<16x32xbf16>, vector<32x32xbf16>, vector<16x32xf32> -> vector<16x32xf32>
    %c0_38 = arith.constant 0 : index
    %c0_39 = arith.constant 0 : index
    %176 = vector.load %arg10[%c0_38, %c0_39] : memref<32x32xbf16, #tpu.memory_space<vmem>>, vector<32x32xbf16>
    %cst_40 = arith.constant dense<0.000000e+00> : vector<16x32xf32>
    %177 = tpu.matmul %171, %176, %cst_40 {dimension_numbers = #tpu.dot_dimension_numbers<[1], [0], [0], [1], [0, 0, 1, 1], [], []>} : vector<16x32xbf16>, vector<32x32xbf16>, vector<16x32xf32> -> vector<16x32xf32>
    %178 = arith.addf %175, %177 : vector<16x32xf32>
    %c0_41 = arith.constant 0 : index
    %c0_42 = arith.constant 0 : index
    %179 = vector.load %arg11[%c0_41, %c0_42] : memref<1x32xf32, #tpu.memory_space<vmem>>, vector<1x32xf32>
    %180 = vector.broadcast %179 : vector<1x32xf32> to vector<16x32xf32>
    %181 = arith.addf %178, %180 : vector<16x32xf32>
    %cst_43 = arith.constant 0.000000e+00 : f32
    %182 = vector.broadcast %cst_43 : f32 to vector<16x32xf32>
    %183 = arith.maximumf %181, %182 : vector<16x32xf32>
    %184 = arith.truncf %183 : vector<16x32xf32> to vector<16x32xbf16>
    %cst_44 = arith.constant dense<0.000000e+00> : vector<16x32xf32>
    %185 = tpu.matmul %170, %184, %cst_44 {dimension_numbers = #tpu.dot_dimension_numbers<[1], [0], [0], [1], [0, 0, 1, 1], [], []>} : vector<16x16xbf16>, vector<16x32xbf16>, vector<16x32xf32> -> vector<16x32xf32>
    %186 = arith.truncf %185 : vector<16x32xf32> to vector<16x32xbf16>
    %c0_45 = arith.constant 0 : index
    %c0_46 = arith.constant 0 : index
    %187 = vector.load %arg12[%c0_45, %c0_46] : memref<32x32xbf16, #tpu.memory_space<vmem>>, vector<32x32xbf16>
    %cst_47 = arith.constant dense<0.000000e+00> : vector<16x32xf32>
    %188 = tpu.matmul %186, %187, %cst_47 {dimension_numbers = #tpu.dot_dimension_numbers<[1], [0], [0], [1], [0, 0, 1, 1], [], []>} : vector<16x32xbf16>, vector<32x32xbf16>, vector<16x32xf32> -> vector<16x32xf32>
    %c0_48 = arith.constant 0 : index
    %c0_49 = arith.constant 0 : index
    %189 = vector.load %arg13[%c0_48, %c0_49] : memref<32x32xbf16, #tpu.memory_space<vmem>>, vector<32x32xbf16>
    %cst_50 = arith.constant dense<0.000000e+00> : vector<16x32xf32>
    %190 = tpu.matmul %184, %189, %cst_50 {dimension_numbers = #tpu.dot_dimension_numbers<[1], [0], [0], [1], [0, 0, 1, 1], [], []>} : vector<16x32xbf16>, vector<32x32xbf16>, vector<16x32xf32> -> vector<16x32xf32>
    %191 = arith.addf %188, %190 : vector<16x32xf32>
    %c0_51 = arith.constant 0 : index
    %c0_52 = arith.constant 0 : index
    %192 = vector.load %arg14[%c0_51, %c0_52] : memref<1x32xf32, #tpu.memory_space<vmem>>, vector<1x32xf32>
    %193 = vector.broadcast %192 : vector<1x32xf32> to vector<16x32xf32>
    %194 = arith.addf %191, %193 : vector<16x32xf32>
    %cst_53 = arith.constant 0.000000e+00 : f32
    %195 = vector.broadcast %cst_53 : f32 to vector<16x32xf32>
    %196 = arith.maximumf %194, %195 : vector<16x32xf32>
    %197 = vector.extract_strided_slice %196 {offsets = [0, 0], sizes = [8, 32], strides = [1, 1]} : vector<16x32xf32> to vector<8x32xf32>
    %198 = arith.truncf %197 : vector<8x32xf32> to vector<8x32xbf16>
    %199 = vector.extract_strided_slice %196 {offsets = [8, 0], sizes = [8, 32], strides = [1, 1]} : vector<16x32xf32> to vector<8x32xf32>
    %200 = arith.truncf %199 : vector<8x32xf32> to vector<8x32xbf16>
    %c0_54 = arith.constant 0 : index
    %c0_55 = arith.constant 0 : index
    %201 = vector.load %arg15[%c0_54, %c0_55] : memref<32x32xbf16, #tpu.memory_space<vmem>>, vector<32x32xbf16>
    %cst_56 = arith.constant dense<0.000000e+00> : vector<8x32xf32>
    %202 = tpu.matmul %198, %201, %cst_56 {dimension_numbers = #tpu.dot_dimension_numbers<[1], [0], [0], [1], [0, 0, 1, 1], [], []>} : vector<8x32xbf16>, vector<32x32xbf16>, vector<8x32xf32> -> vector<8x32xf32>
    %c0_57 = arith.constant 0 : index
    %c0_58 = arith.constant 0 : index
    %203 = vector.load %arg16[%c0_57, %c0_58] : memref<32x32xbf16, #tpu.memory_space<vmem>>, vector<32x32xbf16>
    %cst_59 = arith.constant dense<0.000000e+00> : vector<8x32xf32>
    %204 = tpu.matmul %200, %203, %cst_59 {dimension_numbers = #tpu.dot_dimension_numbers<[1], [0], [0], [1], [0, 0, 1, 1], [], []>} : vector<8x32xbf16>, vector<32x32xbf16>, vector<8x32xf32> -> vector<8x32xf32>
    %205 = arith.addf %202, %204 : vector<8x32xf32>
    %c0_60 = arith.constant 0 : index
    %c0_61 = arith.constant 0 : index
    %206 = vector.load %arg17[%c0_60, %c0_61] : memref<1x32xf32, #tpu.memory_space<vmem>>, vector<1x32xf32>
    %207 = vector.broadcast %206 : vector<1x32xf32> to vector<8x32xf32>
    %208 = arith.addf %205, %207 : vector<8x32xf32>
    %cst_62 = arith.constant 0.000000e+00 : f32
    %209 = vector.broadcast %cst_62 : f32 to vector<8x32xf32>
    %210 = arith.maximumf %208, %209 : vector<8x32xf32>
    %211 = arith.truncf %210 : vector<8x32xf32> to vector<8x32xbf16>
    %c0_63 = arith.constant 0 : index
    %c0_64 = arith.constant 0 : index
    %212 = vector.load %arg18[%c0_63, %c0_64] : memref<32x128xbf16, #tpu.memory_space<vmem>>, vector<32x128xbf16>
    %cst_65 = arith.constant dense<0.000000e+00> : vector<8x128xf32>
    %213 = tpu.matmul %211, %212, %cst_65 {dimension_numbers = #tpu.dot_dimension_numbers<[1], [0], [0], [1], [0, 0, 1, 1], [], []>} : vector<8x32xbf16>, vector<32x128xbf16>, vector<8x128xf32> -> vector<8x128xf32>
    %c0_66 = arith.constant 0 : index
    %c0_67 = arith.constant 0 : index
    %214 = vector.load %arg19[%c0_66, %c0_67] : memref<1x128xf32, #tpu.memory_space<vmem>>, vector<1x128xf32>
    %215 = vector.broadcast %214 : vector<1x128xf32> to vector<8x128xf32>
    %216 = arith.addf %213, %215 : vector<8x128xf32>
    %217 = arith.negf %216 : vector<8x128xf32>
    %218 = math.exp %217 : vector<8x128xf32>
    %cst_68 = arith.constant 1.000000e+00 : f32
    %219 = vector.broadcast %cst_68 : f32 to vector<8x128xf32>
    %220 = arith.addf %219, %218 : vector<8x128xf32>
    %221 = arith.divf %219, %220 : vector<8x128xf32>
    %c0_69 = arith.constant 0 : index
    %c0_70 = arith.constant 0 : index
    %222 = vector.load %arg20[%c0_69, %c0_70] : memref<8x128xf32, #tpu.memory_space<vmem>>, vector<8x128xf32>
    tpu.vector_store %arg20[%c0_69, %c0_70], %221 {strides = array<i32>} : memref<8x128xf32, #tpu.memory_space<vmem>>, vector<8x128xf32>,
    return
  }
  func.func @transform_0(%arg0: i32) -> (i32, i32) {
    %c0_i32 = arith.constant 0 : i32
    %c0_i32_0 = arith.constant 0 : i32
    %c0_i32_1 = arith.constant 0 : i32
    return %c0_i32, %c0_i32_0 : i32, i32
  }
  func.func @transform_1(%arg0: i32) -> (i32, i32) {
    %c0_i32 = arith.constant 0 : i32
    %c0_i32_0 = arith.constant 0 : i32
    %c0_i32_1 = arith.constant 0 : i32
    return %c0_i32, %c0_i32_0 : i32, i32
  }
  func.func @transform_2(%arg0: i32) -> (i32, i32) {
    %c0_i32 = arith.constant 0 : i32
    %c0_i32_0 = arith.constant 0 : i32
    %c0_i32_1 = arith.constant 0 : i32
    return %c0_i32, %c0_i32_0 : i32, i32
  }
  func.func @transform_3(%arg0: i32) -> (i32, i32) {
    %c0_i32 = arith.constant 0 : i32
    %c0_i32_0 = arith.constant 0 : i32
    %c0_i32_1 = arith.constant 0 : i32
    return %c0_i32, %c0_i32_0 : i32, i32
  }
  func.func @transform_4(%arg0: i32) -> (i32, i32) {
    %c0_i32 = arith.constant 0 : i32
    %c0_i32_0 = arith.constant 0 : i32
    %c0_i32_1 = arith.constant 0 : i32
    return %c0_i32, %c0_i32_0 : i32, i32
  }
  func.func @transform_5(%arg0: i32) -> (i32, i32) {
    %c0_i32 = arith.constant 0 : i32
    %c0_i32_0 = arith.constant 0 : i32
    %c0_i32_1 = arith.constant 0 : i32
    return %c0_i32, %c0_i32_0 : i32, i32
  }
  func.func @transform_6(%arg0: i32) -> (i32, i32) {
    %c0_i32 = arith.constant 0 : i32
    %c0_i32_0 = arith.constant 0 : i32
    %c0_i32_1 = arith.constant 0 : i32
    return %c0_i32, %c0_i32_0 : i32, i32
  }
  func.func @transform_7(%arg0: i32) -> (i32, i32) {
    %c0_i32 = arith.constant 0 : i32
    %c0_i32_0 = arith.constant 0 : i32
    %c0_i32_1 = arith.constant 0 : i32
    return %c0_i32, %c0_i32_0 : i32, i32
  }
  func.func @transform_8(%arg0: i32) -> (i32, i32) {
    %c0_i32 = arith.constant 0 : i32
    %c0_i32_0 = arith.constant 0 : i32
    %c0_i32_1 = arith.constant 0 : i32
    return %c0_i32, %c0_i32_0 : i32, i32
  }
  func.func @transform_9(%arg0: i32) -> (i32, i32) {
    %c0_i32 = arith.constant 0 : i32
    %c0_i32_0 = arith.constant 0 : i32
    %c0_i32_1 = arith.constant 0 : i32
    return %c0_i32, %c0_i32_0 : i32, i32
  }
  func.func @transform_10(%arg0: i32) -> (i32, i32) {
    %c0_i32 = arith.constant 0 : i32
    %c0_i32_0 = arith.constant 0 : i32
    %c0_i32_1 = arith.constant 0 : i32
    return %c0_i32, %c0_i32_0 : i32, i32
  }
  func.func @transform_11(%arg0: i32) -> (i32, i32) {
    %c0_i32 = arith.constant 0 : i32
    %c0_i32_0 = arith.constant 0 : i32
    %c0_i32_1 = arith.constant 0 : i32
    return %c0_i32, %c0_i32_0 : i32, i32
  }
  func.func @transform_12(%arg0: i32) -> (i32, i32) {
    %c0_i32 = arith.constant 0 : i32
    %c0_i32_0 = arith.constant 0 : i32
    %c0_i32_1 = arith.constant 0 : i32
    return %c0_i32, %c0_i32_0 : i32, i32
  }
  func.func @transform_13(%arg0: i32) -> (i32, i32) {
    %c0_i32 = arith.constant 0 : i32
    %c0_i32_0 = arith.constant 0 : i32
    %c0_i32_1 = arith.constant 0 : i32
    return %c0_i32, %c0_i32_0 : i32, i32
  }
  func.func @transform_14(%arg0: i32) -> (i32, i32) {
    %c0_i32 = arith.constant 0 : i32
    %c0_i32_0 = arith.constant 0 : i32
    %c0_i32_1 = arith.constant 0 : i32
    return %c0_i32, %c0_i32_0 : i32, i32
  }
  func.func @transform_15(%arg0: i32) -> (i32, i32) {
    %c0_i32 = arith.constant 0 : i32
    %c0_i32_0 = arith.constant 0 : i32
    %c0_i32_1 = arith.constant 0 : i32
    return %c0_i32, %c0_i32_0 : i32, i32
  }
  func.func @transform_16(%arg0: i32) -> (i32, i32) {
    %c0_i32 = arith.constant 0 : i32
    %c0_i32_0 = arith.constant 0 : i32
    %c0_i32_1 = arith.constant 0 : i32
    return %c0_i32, %c0_i32_0 : i32, i32
  }
  func.func @transform_17(%arg0: i32) -> (i32, i32) {
    %c0_i32 = arith.constant 0 : i32
    %c0_i32_0 = arith.constant 0 : i32
    %c0_i32_1 = arith.constant 0 : i32
    return %c0_i32, %c0_i32_0 : i32, i32
  }
  func.func @transform_18(%arg0: i32) -> (i32, i32) {
    %c0_i32 = arith.constant 0 : i32
    %c0_i32_0 = arith.constant 0 : i32
    %c0_i32_1 = arith.constant 0 : i32
    return %c0_i32, %c0_i32_0 : i32, i32
  }
  func.func @transform_19(%arg0: i32) -> (i32, i32) {
    %c0_i32 = arith.constant 0 : i32
    %c0_i32_0 = arith.constant 0 : i32
    %c0_i32_1 = arith.constant 0 : i32
    return %c0_i32, %c0_i32_0 : i32, i32
  }
}

</mosaic_0001>

<llo_original>
// kernel: gnn_recommender_forward.1
$region0: #{gnn_recommender_forward.1}
  #allocation0 [shape = 'u32[]', space=smem, size = 0x4, offset = 0x4, fixed_abs, tag = 'smem constant byte address 0x4 - core index']
  #allocation1 [shape = 'u32[144,128]{1,0:T(1,128)}', space=vmem, size = 0x12000, scoped, tag = 'internal scratch']
  %s0 = inlined_call_operand.vmem [shape: f32[64,32], index: 0, kind: input, shape index: {}]
  %s1 = inlined_call_operand.vmem [shape: f32[8,32], index: 1, kind: input, shape index: {}]
  %s2 = inlined_call_operand.vmem [shape: bf16[16,16], index: 2, kind: input, shape index: {}]
  %s3 = inlined_call_operand.vmem [shape: bf16[32,128], index: 3, kind: input, shape index: {}]
  %s4 = inlined_call_operand.vmem [shape: bf16[32,128], index: 4, kind: input, shape index: {}]
  %s5 = inlined_call_operand.vmem [shape: f32[1,128], index: 5, kind: input, shape index: {}]
  %s6 = inlined_call_operand.vmem [shape: bf16[32,32], index: 6, kind: input, shape index: {}]
  %s7 = inlined_call_operand.vmem [shape: f32[1,32], index: 7, kind: input, shape index: {}]
  %s8 = inlined_call_operand.vmem [shape: bf16[32,32], index: 8, kind: input, shape index: {}]
  %s9 = inlined_call_operand.vmem [shape: bf16[32,32], index: 9, kind: input, shape index: {}]
  %s10 = inlined_call_operand.vmem [shape: f32[1,32], index: 10, kind: input, shape index: {}]
  %s11 = inlined_call_operand.vmem [shape: bf16[32,32], index: 11, kind: input, shape index: {}]
  %s12 = inlined_call_operand.vmem [shape: bf16[32,32], index: 12, kind: input, shape index: {}]
  %s13 = inlined_call_operand.vmem [shape: f32[1,32], index: 13, kind: input, shape index: {}]
  %s14 = inlined_call_operand.vmem [shape: bf16[32,32], index: 14, kind: input, shape index: {}]
  %s15 = inlined_call_operand.vmem [shape: bf16[32,32], index: 15, kind: input, shape index: {}]
  %s16 = inlined_call_operand.vmem [shape: f32[1,32], index: 16, kind: input, shape index: {}]
  %s17 = inlined_call_operand.vmem [shape: bf16[32,128], index: 17, kind: input, shape index: {}]
  %s18 = inlined_call_operand.vmem [shape: f32[1,128], index: 18, kind: input, shape index: {}]
  %s19 = inlined_call_operand.vmem [shape: f32[8,128], index: 19, kind: output, shape index: {}]
  %s20 = sld [smem:[#allocation0]]
  $region86: #{gnn_recommender_forward.1} parent=0
    _
  %s22 = ssub.s32 1, %s20
  %s23 = scalar_select 0, %s22, %s20
  // Predicated region
  $region2: #{gnn_recommender_forward.1} parent=0 // pred_check
    _
  $region3: #{gnn_recommender_forward.1} parent=0 // pred_check_branch
    %25 = sbr.rel (0) target = $region5
  $region4: #{gnn_recommender_forward.1} parent=0 // pred_region
    _
  $region5: #{gnn_recommender_forward.1} parent=0 // pred_fallthru
    _
  // Predicated region
  $region6: #{gnn_recommender_forward.1} parent=0 // pred_check
    _
  $region7: #{gnn_recommender_forward.1} parent=0 // pred_check_branch
    %27 = sbr.rel (0) target = $region9
  $region8: #{gnn_recommender_forward.1} parent=0 // pred_region
    _
  $region9: #{gnn_recommender_forward.1} parent=0 // pred_fallthru
    _
  // Predicated region
  $region10: #{gnn_recommender_forward.1} parent=0 // pred_check
    _
  $region11: #{gnn_recommender_forward.1} parent=0 // pred_check_branch
    %29 = sbr.rel (0) target = $region13
  $region12: #{gnn_recommender_forward.1} parent=0 // pred_region
    _
  $region13: #{gnn_recommender_forward.1} parent=0 // pred_fallthru
    _
  // Predicated region
  $region14: #{gnn_recommender_forward.1} parent=0 // pred_check
    _
  $region15: #{gnn_recommender_forward.1} parent=0 // pred_check_branch
    %31 = sbr.rel (0) target = $region17
  $region16: #{gnn_recommender_forward.1} parent=0 // pred_region
    _
  $region17: #{gnn_recommender_forward.1} parent=0 // pred_fallthru
    _
  // Predicated region
  $region18: #{gnn_recommender_forward.1} parent=0 // pred_check
    _
  $region19: #{gnn_recommender_forward.1} parent=0 // pred_check_branch
    %33 = sbr.rel (0) target = $region21
  $region20: #{gnn_recommender_forward.1} parent=0 // pred_region
    _
  $region21: #{gnn_recommender_forward.1} parent=0 // pred_fallthru
    _
  // Predicated region
  $region22: #{gnn_recommender_forward.1} parent=0 // pred_check
    _
  $region23: #{gnn_recommender_forward.1} parent=0 // pred_check_branch
    %35 = sbr.rel (0) target = $region25
  $region24: #{gnn_recommender_forward.1} parent=0 // pred_region
    _
  $region25: #{gnn_recommender_forward.1} parent=0 // pred_fallthru
    _
  // Predicated region
  $region26: #{gnn_recommender_forward.1} parent=0 // pred_check
    _
  $region27: #{gnn_recommender_forward.1} parent=0 // pred_check_branch
    %37 = sbr.rel (0) target = $region29
  $region28: #{gnn_recommender_forward.1} parent=0 // pred_region
    _
  $region29: #{gnn_recommender_forward.1} parent=0 // pred_fallthru
    _
  // Predicated region
  $region30: #{gnn_recommender_forward.1} parent=0 // pred_check
    _
  $region31: #{gnn_recommender_forward.1} parent=0 // pred_check_branch
    %39 = sbr.rel (0) target = $region33
  $region32: #{gnn_recommender_forward.1} parent=0 // pred_region
    _
  $region33: #{gnn_recommender_forward.1} parent=0 // pred_fallthru
    _
  // Predicated region
  $region34: #{gnn_recommender_forward.1} parent=0 // pred_check
    _
  $region35: #{gnn_recommender_forward.1} parent=0 // pred_check_branch
    %41 = sbr.rel (0) target = $region37
  $region36: #{gnn_recommender_forward.1} parent=0 // pred_region
    _
  $region37: #{gnn_recommender_forward.1} parent=0 // pred_fallthru
    _
  // Predicated region
  $region38: #{gnn_recommender_forward.1} parent=0 // pred_check
    _
  $region39: #{gnn_recommender_forward.1} parent=0 // pred_check_branch
    %43 = sbr.rel (0) target = $region41
  $region40: #{gnn_recommender_forward.1} parent=0 // pred_region
    _
  $region41: #{gnn_recommender_forward.1} parent=0 // pred_fallthru
    _
  // Predicated region
  $region42: #{gnn_recommender_forward.1} parent=0 // pred_check
    _
  $region43: #{gnn_recommender_forward.1} parent=0 // pred_check_branch
    %45 = sbr.rel (0) target = $region45
  $region44: #{gnn_recommender_forward.1} parent=0 // pred_region
    _
  $region45: #{gnn_recommender_forward.1} parent=0 // pred_fallthru
    _
  // Predicated region
  $region46: #{gnn_recommender_forward.1} parent=0 // pred_check
    _
  $region47: #{gnn_recommender_forward.1} parent=0 // pred_check_branch
    %47 = sbr.rel (0) target = $region49
  $region48: #{gnn_recommender_forward.1} parent=0 // pred_region
    _
  $region49: #{gnn_recommender_forward.1} parent=0 // pred_fallthru
    _
  // Predicated region
  $region50: #{gnn_recommender_forward.1} parent=0 // pred_check
    _
  $region51: #{gnn_recommender_forward.1} parent=0 // pred_check_branch
    %49 = sbr.rel (0) target = $region53
  $region52: #{gnn_recommender_forward.1} parent=0 // pred_region
    _
  $region53: #{gnn_recommender_forward.1} parent=0 // pred_fallthru
    _
  // Predicated region
  $region54: #{gnn_recommender_forward.1} parent=0 // pred_check
    _
  $region55: #{gnn_recommender_forward.1} parent=0 // pred_check_branch
    %51 = sbr.rel (0) target = $region57
  $region56: #{gnn_recommender_forward.1} parent=0 // pred_region
    _
  $region57: #{gnn_recommender_forward.1} parent=0 // pred_fallthru
    _
  // Predicated region
  $region58: #{gnn_recommender_forward.1} parent=0 // pred_check
    _
  $region59: #{gnn_recommender_forward.1} parent=0 // pred_check_branch
    %53 = sbr.rel (0) target = $region61
  $region60: #{gnn_recommender_forward.1} parent=0 // pred_region
    _
  $region61: #{gnn_recommender_forward.1} parent=0 // pred_fallthru
    _
  // Predicated region
  $region62: #{gnn_recommender_forward.1} parent=0 // pred_check
    _
  $region63: #{gnn_recommender_forward.1} parent=0 // pred_check_branch
    %55 = sbr.rel (0) target = $region65
  $region64: #{gnn_recommender_forward.1} parent=0 // pred_region
    _
  $region65: #{gnn_recommender_forward.1} parent=0 // pred_fallthru
    _
  // Predicated region
  $region66: #{gnn_recommender_forward.1} parent=0 // pred_check
    _
  $region67: #{gnn_recommender_forward.1} parent=0 // pred_check_branch
    %57 = sbr.rel (0) target = $region69
  $region68: #{gnn_recommender_forward.1} parent=0 // pred_region
    _
  $region69: #{gnn_recommender_forward.1} parent=0 // pred_fallthru
    _
  // Predicated region
  $region70: #{gnn_recommender_forward.1} parent=0 // pred_check
    _
  $region71: #{gnn_recommender_forward.1} parent=0 // pred_check_branch
    %59 = sbr.rel (0) target = $region73
  $region72: #{gnn_recommender_forward.1} parent=0 // pred_region
    _
  $region73: #{gnn_recommender_forward.1} parent=0 // pred_fallthru
    _
  // Predicated region
  $region74: #{gnn_recommender_forward.1} parent=0 // pred_check
    _
  $region75: #{gnn_recommender_forward.1} parent=0 // pred_check_branch
    %61 = sbr.rel (0) target = $region77
  $region76: #{gnn_recommender_forward.1} parent=0 // pred_region
    _
  $region77: #{gnn_recommender_forward.1} parent=0 // pred_fallthru
    _
  %v63 = vld [vmem:[%s0] sm:$0xff]
  %v64 = vld [vmem:[%s0 + $0x8] sm:$0xff]
  %v65 = vld [vmem:[%s0 + $0x10] sm:$0xff]
  %v66 = vld [vmem:[%s0 + $0x18] sm:$0xff]
  %v67 = vld [vmem:[%s0 + $0x20] sm:$0xff]
  %v68 = vld [vmem:[%s0 + $0x28] sm:$0xff]
  %v69 = vld [vmem:[%s0 + $0x30] sm:$0xff]
  %v70 = vld [vmem:[%s0 + $0x38] sm:$0xff]
  %v71 = vpack.c.bf16 %v64, %v63
  %v72 = vpack.c.bf16 %v66, %v65
  %v73 = vpack.c.bf16 %v68, %v67
  %v74 = vpack.c.bf16 %v70, %v69
  %v75 = vld [vmem:[%s3] sm:$0xf]
  %v76 = vld [vmem:[%s3 + $0x4] sm:$0xf]
  %v77 = vld [vmem:[%s3 + $0x8] sm:$0xf]
  %v78 = vld [vmem:[%s3 + $0xc] sm:$0xf]
  %v79 = vld [vmem:[%s5] sm:$0x1]
  %v81 = vlaneseq
  %v82 = vshrl.u32 %v81, 7
  %v83 = vsub.s32 0, %v82
  %v84 = vrot.slane %v79, %v83
  %v90 = vunpack.c.l.b16 %v75
  %v91 = vunpack.c.l.b16 %v76
  %v92 = vunpack.c.l.b16 %v77
  %v93 = vunpack.c.l.b16 %v78
  %v94 = vpack.c.b16 %v91, %v90
  %v95 = vpack.c.b16 %v93, %v92
  %vm98 = vcmask 261120
  %v100 = vsel %vm98, %v71, 0
  %v103 = vsel %vm98, %v72, 0
  %v106 = vsel %vm98, %v73, 0
  %v109 = vsel %vm98, %v74, 0
  %111 = vmatprep.subr.bf16.mxu0 0
  %112 = vmatpush1.bf16.msra.mxu0 %v94
  %113 = vmatprep.subr.bf16.mxu0 0
  %114 = vmatpush1.bf16.msra.mxu0 %v95
  %115 = vmatprep.subr.bf16.mxu0 0
  %116 = vmatpush1.bf16.msra.mxu0 0
  %117 = vmatprep.subr.bf16.mxu0 0
  %118 = vmatpush1.bf16.msra.mxu0 0
  %119 = vmatprep.subr.bf16.mxu0 0
  %120 = vmatpush1.bf16.msra.mxu0 0
  %121 = vmatprep.subr.bf16.mxu0 0
  %122 = vmatpush1.bf16.msra.mxu0 0
  %123 = vmatprep.subr.bf16.mxu0 0
  %124 = vmatpush1.bf16.msra.mxu0 0
  %125 = vmatprep.subr.bf16.mxu0 0
  %126 = vmatpush1.bf16.msra.mxu0 0
  %127 = vmatprep.subr.bf16.mxu0 0
  %128 = vmatpush1.bf16.msra.mxu0 0
  %129 = vmatprep.subr.bf16.mxu0 0
  %130 = vmatpush1.bf16.msra.mxu0 0
  %131 = vmatprep.subr.bf16.mxu0 0
  %132 = vmatpush1.bf16.msra.mxu0 0
  %133 = vmatprep.subr.bf16.mxu0 0
  %134 = vmatpush1.bf16.msra.mxu0 0
  %135 = vmatprep.subr.bf16.mxu0 0
  %136 = vmatpush1.bf16.msra.mxu0 0
  %137 = vmatprep.subr.bf16.mxu0 0
  %138 = vmatpush1.bf16.msra.mxu0 0
  %139 = vmatprep.subr.bf16.mxu0 0
  %140 = vmatpush1.bf16.msra.mxu0 0
  %141 = vmatprep.subr.bf16.mxu0 0
  %142 = vmatpush1.bf16.msra.mxu0 0
  %143 = vmatprep.mubr.bf16.mxu0 0
  %144 = vmatmul.mubr.bf16.gmra.mrb[0].mxu0 %v100
  %v145 = vpop.f32.mrb[0].mxu0
  %v146 = vadd.f32 %v84, %v145
  %v147 = vpop.f32.mrb[0].mxu0
  %v148 = vpop.f32.mrb[0].mxu0
  %v149 = vadd.f32 %v84, %v148
  %v150 = vpop.f32.mrb[0].mxu0
  %151 = vmatprep.mubr.bf16.mxu0 0
  %152 = vmatmul.mubr.bf16.gmra.mrb[0].mxu0 %v103
  %v153 = vpop.f32.mrb[0].mxu0
  %v154 = vadd.f32 %v84, %v153
  %v155 = vpop.f32.mrb[0].mxu0
  %v156 = vpop.f32.mrb[0].mxu0
  %v157 = vadd.f32 %v84, %v156
  %v158 = vpop.f32.mrb[0].mxu0
  %159 = vmatprep.mubr.bf16.mxu0 0
  %160 = vmatmul.mubr.bf16.gmra.mrb[0].mxu0 %v106
  %v161 = vpop.f32.mrb[0].mxu0
  %v162 = vadd.f32 %v84, %v161
  %v163 = vpop.f32.mrb[0].mxu0
  %v164 = vpop.f32.mrb[0].mxu0
  %v165 = vadd.f32 %v84, %v164
  %v166 = vpop.f32.mrb[0].mxu0
  %167 = vmatprep.mubr.bf16.mxu0 0
  %168 = vmatmul.mubr.bf16.gmra.mrb[0].mxu0 %v109
  %v169 = vpop.f32.mrb[0].mxu0
  %v170 = vadd.f32 %v84, %v169
  %v171 = vpop.f32.mrb[0].mxu0
  %v172 = vpop.f32.mrb[0].mxu0
  %v173 = vadd.f32 %v84, %v172
  %v174 = vpop.f32.mrb[0].mxu0
  %175 = vdwg.mxu0
  %v176 = vld [vmem:[%s4] sm:$0xf]
  %v177 = vld [vmem:[%s4 + $0x4] sm:$0xf]
  %v178 = vld [vmem:[%s4 + $0x8] sm:$0xf]
  %v179 = vld [vmem:[%s4 + $0xc] sm:$0xf]
  %v184 = vunpack.c.l.b16 %v176
  %v185 = vunpack.c.l.b16 %v177
  %v186 = vunpack.c.l.b16 %v178
  %v187 = vunpack.c.l.b16 %v179
  %v188 = vpack.c.b16 %v185, %v184
  %v189 = vpack.c.b16 %v187, %v186
  %v193 = vsel %vm98, 0, 0
  %195 = vmatprep.subr.bf16.mxu0 0
  %196 = vmatpush1.bf16.msra.mxu0 %v188
  %197 = vmatprep.subr.bf16.mxu0 0
  %198 = vmatpush1.bf16.msra.mxu0 %v189
  %199 = vmatprep.subr.bf16.mxu0 0
  %200 = vmatpush1.bf16.msra.mxu0 0
  %201 = vmatprep.subr.bf16.mxu0 0
  %202 = vmatpush1.bf16.msra.mxu0 0
  %203 = vmatprep.subr.bf16.mxu0 0
  %204 = vmatpush1.bf16.msra.mxu0 0
  %205 = vmatprep.subr.bf16.mxu0 0
  %206 = vmatpush1.bf16.msra.mxu0 0
  %207 = vmatprep.subr.bf16.mxu0 0
  %208 = vmatpush1.bf16.msra.mxu0 0
  %209 = vmatprep.subr.bf16.mxu0 0
  %210 = vmatpush1.bf16.msra.mxu0 0
  %211 = vmatprep.subr.bf16.mxu0 0
  %212 = vmatpush1.bf16.msra.mxu0 0
  %213 = vmatprep.subr.bf16.mxu0 0
  %214 = vmatpush1.bf16.msra.mxu0 0
  %215 = vmatprep.subr.bf16.mxu0 0
  %216 = vmatpush1.bf16.msra.mxu0 0
  %217 = vmatprep.subr.bf16.mxu0 0
  %218 = vmatpush1.bf16.msra.mxu0 0
  %219 = vmatprep.subr.bf16.mxu0 0
  %220 = vmatpush1.bf16.msra.mxu0 0
  %221 = vmatprep.subr.bf16.mxu0 0
  %222 = vmatpush1.bf16.msra.mxu0 0
  %223 = vmatprep.subr.bf16.mxu0 0
  %224 = vmatpush1.bf16.msra.mxu0 0
  %225 = vmatprep.subr.bf16.mxu0 0
  %226 = vmatpush1.bf16.msra.mxu0 0
  %227 = vmatprep.mubr.bf16.mxu0 0
  %228 = vmatmul.mubr.bf16.gmra.mrb[0].mxu0 %v193
  %v229 = vpop.f32.mrb[0].mxu0
  %v230 = vadd.f32 0.0, %v229
  %v231 = vpop.f32.mrb[0].mxu0
  %v232 = vpop.f32.mrb[0].mxu0
  %v233 = vpop.f32.mrb[0].mxu0
  %234 = vdwg.mxu0
  %v235 = vadd.f32 %v146, %v230
  %v236 = vxor.u32 %v235, 2147483648
  %v237 = vmul.f32 %v236, 1.442695
  %v238 = vpow.pop %v237
  %v239 = vadd.f32 %v238, 1.0
  %v240 = vrcp.pop %v239
  %v241 = vmul.f32 1.0, %v240
  %v242 = vtanh.pop %v235
  %v243 = vmul.f32 %v241, 0.0
  %245 = vrot.lane.b32.xlu0 %v242, 32
  %v246 = vpop.permute.xlu0 %245
  %v248 = vmul.f32 %v241, %v246
  %250 = vrot.lane.b32.xlu0 %v248, 32
  %v251 = vpop.permute.xlu0 %250
  %v253 = vadd.f32 %v243, %v251
  %v254 = vtanh.pop %v253
  %256 = vrot.lane.b32.xlu0 %v254, 32
  %v257 = vpop.permute.xlu0 %256
  %v259 = vmul.f32 %v241, %v257
  %v260 = vpack.c.bf16 %v259, %v259
  %262 = vrot.lane.b32.xlu0 %v260, 64
  %v263 = vpop.permute.xlu0 %262
  %v265 = vsel %vm98, %v263, 0
  %267 = vmatprep.subr.bf16.mxu0 0
  %268 = vmatpush1.bf16.msra.mxu0 %v188
  %269 = vmatprep.subr.bf16.mxu0 0
  %270 = vmatpush1.bf16.msra.mxu0 %v189
  %271 = vmatprep.subr.bf16.mxu0 0
  %272 = vmatpush1.bf16.msra.mxu0 0
  %273 = vmatprep.subr.bf16.mxu0 0
  %274 = vmatpush1.bf16.msra.mxu0 0
  %275 = vmatprep.subr.bf16.mxu0 0
  %276 = vmatpush1.bf16.msra.mxu0 0
  %277 = vmatprep.subr.bf16.mxu0 0
  %278 = vmatpush1.bf16.msra.mxu0 0
  %279 = vmatprep.subr.bf16.mxu0 0
  %280 = vmatpush1.bf16.msra.mxu0 0
  %281 = vmatprep.subr.bf16.mxu0 0
  %282 = vmatpush1.bf16.msra.mxu0 0
  %283 = vmatprep.subr.bf16.mxu0 0
  %284 = vmatpush1.bf16.msra.mxu0 0
  %285 = vmatprep.subr.bf16.mxu0 0
  %286 = vmatpush1.bf16.msra.mxu0 0
  %287 = vmatprep.subr.bf16.mxu0 0
  %288 = vmatpush1.bf16.msra.mxu0 0
  %289 = vmatprep.subr.bf16.mxu0 0
  %290 = vmatpush1.bf16.msra.mxu0 0
  %291 = vmatprep.subr.bf16.mxu0 0
  %292 = vmatpush1.bf16.msra.mxu0 0
  %293 = vmatprep.subr.bf16.mxu0 0
  %294 = vmatpush1.bf16.msra.mxu0 0
  %295 = vmatprep.subr.bf16.mxu0 0
  %296 = vmatpush1.bf16.msra.mxu0 0
  %297 = vmatprep.subr.bf16.mxu0 0
  %298 = vmatpush1.bf16.msra.mxu0 0
  %299 = vmatprep.mubr.bf16.mxu0 0
  %300 = vmatmul.mubr.bf16.gmra.mrb[0].mxu0 %v265
  %v301 = vpop.f32.mrb[0].mxu0
  %v302 = vadd.f32 0.0, %v301
  %v303 = vpop.f32.mrb[0].mxu0
  %v304 = vpop.f32.mrb[0].mxu0
  %v305 = vpop.f32.mrb[0].mxu0
  %306 = vdwg.mxu0
  %v307 = vadd.f32 %v149, %v302
  %v308 = vxor.u32 %v307, 2147483648
  %v309 = vmul.f32 %v308, 1.442695
  %v310 = vpow.pop %v309
  %v311 = vadd.f32 %v310, 1.0
  %v312 = vrcp.pop %v311
  %v313 = vmul.f32 1.0, %v312
  %v314 = vtanh.pop %v307
  %v315 = vmul.f32 %v313, %v253
  %317 = vrot.lane.b32.xlu0 %v314, 32
  %v318 = vpop.permute.xlu0 %317
  %v320 = vmul.f32 %v313, %v318
  %322 = vrot.lane.b32.xlu0 %v320, 32
  %v323 = vpop.permute.xlu0 %322
  %v325 = vadd.f32 %v315, %v323
  %v326 = vtanh.pop %v325
  %328 = vrot.lane.b32.xlu0 %v326, 32
  %v329 = vpop.permute.xlu0 %328
  %v331 = vmul.f32 %v313, %v329
  %v332 = vpack.c.bf16 %v331, %v331
  %334 = vrot.lane.b32.xlu0 %v332, 64
  %v335 = vpop.permute.xlu0 %334
  %v337 = vsel %vm98, %v335, 0
  %339 = vmatprep.subr.bf16.mxu0 0
  %340 = vmatpush1.bf16.msra.mxu0 %v188
  %341 = vmatprep.subr.bf16.mxu0 0
  %342 = vmatpush1.bf16.msra.mxu0 %v189
  %343 = vmatprep.subr.bf16.mxu0 0
  %344 = vmatpush1.bf16.msra.mxu0 0
  %345 = vmatprep.subr.bf16.mxu0 0
  %346 = vmatpush1.bf16.msra.mxu0 0
  %347 = vmatprep.subr.bf16.mxu0 0
  %348 = vmatpush1.bf16.msra.mxu0 0
  %349 = vmatprep.subr.bf16.mxu0 0
  %350 = vmatpush1.bf16.msra.mxu0 0
  %351 = vmatprep.subr.bf16.mxu0 0
  %352 = vmatpush1.bf16.msra.mxu0 0
  %353 = vmatprep.subr.bf16.mxu0 0
  %354 = vmatpush1.bf16.msra.mxu0 0
  %355 = vmatprep.subr.bf16.mxu0 0
  %356 = vmatpush1.bf16.msra.mxu0 0
  %357 = vmatprep.subr.bf16.mxu0 0
  %358 = vmatpush1.bf16.msra.mxu0 0
  %359 = vmatprep.subr.bf16.mxu0 0
  %360 = vmatpush1.bf16.msra.mxu0 0
  %361 = vmatprep.subr.bf16.mxu0 0
  %362 = vmatpush1.bf16.msra.mxu0 0
  %363 = vmatprep.subr.bf16.mxu0 0
  %364 = vmatpush1.bf16.msra.mxu0 0
  %365 = vmatprep.subr.bf16.mxu0 0
  %366 = vmatpush1.bf16.msra.mxu0 0
  %367 = vmatprep.subr.bf16.mxu0 0
  %368 = vmatpush1.bf16.msra.mxu0 0
  %369 = vmatprep.subr.bf16.mxu0 0
  %370 = vmatpush1.bf16.msra.mxu0 0
  %371 = vmatprep.mubr.bf16.mxu0 0
  %372 = vmatmul.mubr.bf16.gmra.mrb[0].mxu0 %v337
  %v373 = vpop.f32.mrb[0].mxu0
  %v374 = vadd.f32 0.0, %v373
  %v375 = vpop.f32.mrb[0].mxu0
  %v376 = vpop.f32.mrb[0].mxu0
  %v377 = vpop.f32.mrb[0].mxu0
  %378 = vdwg.mxu0
  %v379 = vadd.f32 %v154, %v374
  %v380 = vxor.u32 %v379, 2147483648
  %v381 = vmul.f32 %v380, 1.442695
  %v382 = vpow.pop %v381
  %v383 = vadd.f32 %v382, 1.0
  %v384 = vrcp.pop %v383
  %v385 = vmul.f32 1.0, %v384
  %v386 = vtanh.pop %v379
  %v387 = vmul.f32 %v385, %v325
  %389 = vrot.lane.b32.xlu0 %v386, 32
  %v390 = vpop.permute.xlu0 %389
  %v392 = vmul.f32 %v385, %v390
  %394 = vrot.lane.b32.xlu0 %v392, 32
  %v395 = vpop.permute.xlu0 %394
  %v397 = vadd.f32 %v387, %v395
  %v398 = vtanh.pop %v397
  %400 = vrot.lane.b32.xlu0 %v398, 32
  %v401 = vpop.permute.xlu0 %400
  %v403 = vmul.f32 %v385, %v401
  %v404 = vpack.c.bf16 %v403, %v403
  %406 = vrot.lane.b32.xlu0 %v404, 64
  %v407 = vpop.permute.xlu0 %406
  %v409 = vsel %vm98, %v407, 0
  %411 = vmatprep.subr.bf16.mxu0 0
  %412 = vmatpush1.bf16.msra.mxu0 %v188
  %413 = vmatprep.subr.bf16.mxu0 0
  %414 = vmatpush1.bf16.msra.mxu0 %v189
  %415 = vmatprep.subr.bf16.mxu0 0
  %416 = vmatpush1.bf16.msra.mxu0 0
  %417 = vmatprep.subr.bf16.mxu0 0
  %418 = vmatpush1.bf16.msra.mxu0 0
  %419 = vmatprep.subr.bf16.mxu0 0
  %420 = vmatpush1.bf16.msra.mxu0 0
  %421 = vmatprep.subr.bf16.mxu0 0
  %422 = vmatpush1.bf16.msra.mxu0 0
  %423 = vmatprep.subr.bf16.mxu0 0
  %424 = vmatpush1.bf16.msra.mxu0 0
  %425 = vmatprep.subr.bf16.mxu0 0
  %426 = vmatpush1.bf16.msra.mxu0 0
  %427 = vmatprep.subr.bf16.mxu0 0
  %428 = vmatpush1.bf16.msra.mxu0 0
  %429 = vmatprep.subr.bf16.mxu0 0
  %430 = vmatpush1.bf16.msra.mxu0 0
  %431 = vmatprep.subr.bf16.mxu0 0
  %432 = vmatpush1.bf16.msra.mxu0 0
  %433 = vmatprep.subr.bf16.mxu0 0
  %434 = vmatpush1.bf16.msra.mxu0 0
  %435 = vmatprep.subr.bf16.mxu0 0
  %436 = vmatpush1.bf16.msra.mxu0 0
  %437 = vmatprep.subr.bf16.mxu0 0
  %438 = vmatpush1.bf16.msra.mxu0 0
  %439 = vmatprep.subr.bf16.mxu0 0
  %440 = vmatpush1.bf16.msra.mxu0 0
  %441 = vmatprep.subr.bf16.mxu0 0
  %442 = vmatpush1.bf16.msra.mxu0 0
  %443 = vmatprep.mubr.bf16.mxu0 0
  %444 = vmatmul.mubr.bf16.gmra.mrb[0].mxu0 %v409
  %v445 = vpop.f32.mrb[0].mxu0
  %v446 = vadd.f32 0.0, %v445
  %v447 = vpop.f32.mrb[0].mxu0
  %v448 = vpop.f32.mrb[0].mxu0
  %v449 = vpop.f32.mrb[0].mxu0
  %450 = vdwg.mxu0
  %v451 = vadd.f32 %v157, %v446
  %v452 = vxor.u32 %v451, 2147483648
  %v453 = vmul.f32 %v452, 1.442695
  %v454 = vpow.pop %v453
  %v455 = vadd.f32 %v454, 1.0
  %v456 = vrcp.pop %v455
  %v457 = vmul.f32 1.0, %v456
  %v458 = vtanh.pop %v451
  %v459 = vmul.f32 %v457, %v397
  %461 = vrot.lane.b32.xlu0 %v458, 32
  %v462 = vpop.permute.xlu0 %461
  %v464 = vmul.f32 %v457, %v462
  %466 = vrot.lane.b32.xlu0 %v464, 32
  %v467 = vpop.permute.xlu0 %466
  %v469 = vadd.f32 %v459, %v467
  %v470 = vtanh.pop %v469
  %472 = vrot.lane.b32.xlu0 %v470, 32
  %v473 = vpop.permute.xlu0 %472
  %v475 = vmul.f32 %v457, %v473
  %v476 = vpack.c.bf16 %v475, %v475
  %478 = vrot.lane.b32.xlu0 %v476, 64
  %v479 = vpop.permute.xlu0 %478
  %v481 = vsel %vm98, %v479, 0
  %483 = vmatprep.subr.bf16.mxu0 0
  %484 = vmatpush1.bf16.msra.mxu0 %v188
  %485 = vmatprep.subr.bf16.mxu0 0
  %486 = vmatpush1.bf16.msra.mxu0 %v189
  %487 = vmatprep.subr.bf16.mxu0 0
  %488 = vmatpush1.bf16.msra.mxu0 0
  %489 = vmatprep.subr.bf16.mxu0 0
  %490 = vmatpush1.bf16.msra.mxu0 0
  %491 = vmatprep.subr.bf16.mxu0 0
  %492 = vmatpush1.bf16.msra.mxu0 0
  %493 = vmatprep.subr.bf16.mxu0 0
  %494 = vmatpush1.bf16.msra.mxu0 0
  %495 = vmatprep.subr.bf16.mxu0 0
  %496 = vmatpush1.bf16.msra.mxu0 0
  %497 = vmatprep.subr.bf16.mxu0 0
  %498 = vmatpush1.bf16.msra.mxu0 0
  %499 = vmatprep.subr.bf16.mxu0 0
  %500 = vmatpush1.bf16.msra.mxu0 0
  %501 = vmatprep.subr.bf16.mxu0 0
  %502 = vmatpush1.bf16.msra.mxu0 0
  %503 = vmatprep.subr.bf16.mxu0 0
  %504 = vmatpush1.bf16.msra.mxu0 0
  %505 = vmatprep.subr.bf16.mxu0 0
  %506 = vmatpush1.bf16.msra.mxu0 0
  %507 = vmatprep.subr.bf16.mxu0 0
  %508 = vmatpush1.bf16.msra.mxu0 0
  %509 = vmatprep.subr.bf16.mxu0 0
  %510 = vmatpush1.bf16.msra.mxu0 0
  %511 = vmatprep.subr.bf16.mxu0 0
  %512 = vmatpush1.bf16.msra.mxu0 0
  %513 = vmatprep.subr.bf16.mxu0 0
  %514 = vmatpush1.bf16.msra.mxu0 0
  %515 = vmatprep.mubr.bf16.mxu0 0
  %516 = vmatmul.mubr.bf16.gmra.mrb[0].mxu0 %v481
  %v517 = vpop.f32.mrb[0].mxu0
  %v518 = vadd.f32 0.0, %v517
  %v519 = vpop.f32.mrb[0].mxu0
  %v520 = vpop.f32.mrb[0].mxu0
  %v521 = vpop.f32.mrb[0].mxu0
  %522 = vdwg.mxu0
  %v523 = vadd.f32 %v162, %v518
  %v524 = vxor.u32 %v523, 2147483648
  %v525 = vmul.f32 %v524, 1.442695
  %v526 = vpow.pop %v525
  %v527 = vadd.f32 %v526, 1.0
  %v528 = vrcp.pop %v527
  %v529 = vmul.f32 1.0, %v528
  %v530 = vtanh.pop %v523
  %v531 = vmul.f32 %v529, %v469
  %533 = vrot.lane.b32.xlu0 %v530, 32
  %v534 = vpop.permute.xlu0 %533
  %v536 = vmul.f32 %v529, %v534
  %538 = vrot.lane.b32.xlu0 %v536, 32
  %v539 = vpop.permute.xlu0 %538
  %v541 = vadd.f32 %v531, %v539
  %v542 = vtanh.pop %v541
  %544 = vrot.lane.b32.xlu0 %v542, 32
  %v545 = vpop.permute.xlu0 %544
  %v547 = vmul.f32 %v529, %v545
  %v548 = vpack.c.bf16 %v547, %v547
  %550 = vrot.lane.b32.xlu0 %v548, 64
  %v551 = vpop.permute.xlu0 %550
  %v553 = vsel %vm98, %v551, 0
  %555 = vmatprep.subr.bf16.mxu0 0
  %556 = vmatpush1.bf16.msra.mxu0 %v188
  %557 = vmatprep.subr.bf16.mxu0 0
  %558 = vmatpush1.bf16.msra.mxu0 %v189
  %559 = vmatprep.subr.bf16.mxu0 0
  %560 = vmatpush1.bf16.msra.mxu0 0
  %561 = vmatprep.subr.bf16.mxu0 0
  %562 = vmatpush1.bf16.msra.mxu0 0
  %563 = vmatprep.subr.bf16.mxu0 0
  %564 = vmatpush1.bf16.msra.mxu0 0
  %565 = vmatprep.subr.bf16.mxu0 0
  %566 = vmatpush1.bf16.msra.mxu0 0
  %567 = vmatprep.subr.bf16.mxu0 0
  %568 = vmatpush1.bf16.msra.mxu0 0
  %569 = vmatprep.subr.bf16.mxu0 0
  %570 = vmatpush1.bf16.msra.mxu0 0
  %571 = vmatprep.subr.bf16.mxu0 0
  %572 = vmatpush1.bf16.msra.mxu0 0
  %573 = vmatprep.subr.bf16.mxu0 0
  %574 = vmatpush1.bf16.msra.mxu0 0
  %575 = vmatprep.subr.bf16.mxu0 0
  %576 = vmatpush1.bf16.msra.mxu0 0
  %577 = vmatprep.subr.bf16.mxu0 0
  %578 = vmatpush1.bf16.msra.mxu0 0
  %579 = vmatprep.subr.bf16.mxu0 0
  %580 = vmatpush1.bf16.msra.mxu0 0
  %581 = vmatprep.subr.bf16.mxu0 0
  %582 = vmatpush1.bf16.msra.mxu0 0
  %583 = vmatprep.subr.bf16.mxu0 0
  %584 = vmatpush1.bf16.msra.mxu0 0
  %585 = vmatprep.subr.bf16.mxu0 0
  %586 = vmatpush1.bf16.msra.mxu0 0
  %587 = vmatprep.mubr.bf16.mxu0 0
  %588 = vmatmul.mubr.bf16.gmra.mrb[0].mxu0 %v553
  %v589 = vpop.f32.mrb[0].mxu0
  %v590 = vadd.f32 0.0, %v589
  %v591 = vpop.f32.mrb[0].mxu0
  %v592 = vpop.f32.mrb[0].mxu0
  %v593 = vpop.f32.mrb[0].mxu0
  %594 = vdwg.mxu0
  %v595 = vadd.f32 %v165, %v590
  %v596 = vxor.u32 %v595, 2147483648
  %v597 = vmul.f32 %v596, 1.442695
  %v598 = vpow.pop %v597
  %v599 = vadd.f32 %v598, 1.0
  %v600 = vrcp.pop %v599
  %v601 = vmul.f32 1.0, %v600
  %v602 = vtanh.pop %v595
  %v603 = vmul.f32 %v601, %v541
  %605 = vrot.lane.b32.xlu0 %v602, 32
  %v606 = vpop.permute.xlu0 %605
  %v608 = vmul.f32 %v601, %v606
  %610 = vrot.lane.b32.xlu0 %v608, 32
  %v611 = vpop.permute.xlu0 %610
  %v613 = vadd.f32 %v603, %v611
  %v614 = vtanh.pop %v613
  %616 = vrot.lane.b32.xlu0 %v614, 32
  %v617 = vpop.permute.xlu0 %616
  %v619 = vmul.f32 %v601, %v617
  %v620 = vpack.c.bf16 %v619, %v619
  %622 = vrot.lane.b32.xlu0 %v620, 64
  %v623 = vpop.permute.xlu0 %622
  %v625 = vsel %vm98, %v623, 0
  %627 = vmatprep.subr.bf16.mxu0 0
  %628 = vmatpush1.bf16.msra.mxu0 %v188
  %629 = vmatprep.subr.bf16.mxu0 0
  %630 = vmatpush1.bf16.msra.mxu0 %v189
  %631 = vmatprep.subr.bf16.mxu0 0
  %632 = vmatpush1.bf16.msra.mxu0 0
  %633 = vmatprep.subr.bf16.mxu0 0
  %634 = vmatpush1.bf16.msra.mxu0 0
  %635 = vmatprep.subr.bf16.mxu0 0
  %636 = vmatpush1.bf16.msra.mxu0 0
  %637 = vmatprep.subr.bf16.mxu0 0
  %638 = vmatpush1.bf16.msra.mxu0 0
  %639 = vmatprep.subr.bf16.mxu0 0
  %640 = vmatpush1.bf16.msra.mxu0 0
  %641 = vmatprep.subr.bf16.mxu0 0
  %642 = vmatpush1.bf16.msra.mxu0 0
  %643 = vmatprep.subr.bf16.mxu0 0
  %644 = vmatpush1.bf16.msra.mxu0 0
  %645 = vmatprep.subr.bf16.mxu0 0
  %646 = vmatpush1.bf16.msra.mxu0 0
  %647 = vmatprep.subr.bf16.mxu0 0
  %648 = vmatpush1.bf16.msra.mxu0 0
  %649 = vmatprep.subr.bf16.mxu0 0
  %650 = vmatpush1.bf16.msra.mxu0 0
  %651 = vmatprep.subr.bf16.mxu0 0
  %652 = vmatpush1.bf16.msra.mxu0 0
  %653 = vmatprep.subr.bf16.mxu0 0
  %654 = vmatpush1.bf16.msra.mxu0 0
  %655 = vmatprep.subr.bf16.mxu0 0
  %656 = vmatpush1.bf16.msra.mxu0 0
  %657 = vmatprep.subr.bf16.mxu0 0
  %658 = vmatpush1.bf16.msra.mxu0 0
  %659 = vmatprep.mubr.bf16.mxu0 0
  %660 = vmatmul.mubr.bf16.gmra.mrb[0].mxu0 %v625
  %v661 = vpop.f32.mrb[0].mxu0
  %v662 = vadd.f32 0.0, %v661
  %v663 = vpop.f32.mrb[0].mxu0
  %v664 = vpop.f32.mrb[0].mxu0
  %v665 = vpop.f32.mrb[0].mxu0
  %666 = vdwg.mxu0
  %v667 = vadd.f32 %v170, %v662
  %v668 = vxor.u32 %v667, 2147483648
  %v669 = vmul.f32 %v668, 1.442695
  %v670 = vpow.pop %v669
  %v671 = vadd.f32 %v670, 1.0
  %v672 = vrcp.pop %v671
  %v673 = vmul.f32 1.0, %v672
  %v674 = vtanh.pop %v667
  %v675 = vmul.f32 %v673, %v613
  %677 = vrot.lane.b32.xlu0 %v674, 32
  %v678 = vpop.permute.xlu0 %677
  %v680 = vmul.f32 %v673, %v678
  %682 = vrot.lane.b32.xlu0 %v680, 32
  %v683 = vpop.permute.xlu0 %682
  %v685 = vadd.f32 %v675, %v683
  %v686 = vtanh.pop %v685
  %688 = vrot.lane.b32.xlu0 %v686, 32
  %v689 = vpop.permute.xlu0 %688
  %v691 = vmul.f32 %v673, %v689
  %v692 = vpack.c.bf16 %v691, %v691
  %694 = vrot.lane.b32.xlu0 %v692, 64
  %v695 = vpop.permute.xlu0 %694
  %v697 = vsel %vm98, %v695, 0
  %699 = vmatprep.subr.bf16.mxu0 0
  %700 = vmatpush1.bf16.msra.mxu0 %v188
  %701 = vmatprep.subr.bf16.mxu0 0
  %702 = vmatpush1.bf16.msra.mxu0 %v189
  %703 = vmatprep.subr.bf16.mxu0 0
  %704 = vmatpush1.bf16.msra.mxu0 0
  %705 = vmatprep.subr.bf16.mxu0 0
  %706 = vmatpush1.bf16.msra.mxu0 0
  %707 = vmatprep.subr.bf16.mxu0 0
  %708 = vmatpush1.bf16.msra.mxu0 0
  %709 = vmatprep.subr.bf16.mxu0 0
  %710 = vmatpush1.bf16.msra.mxu0 0
  %711 = vmatprep.subr.bf16.mxu0 0
  %712 = vmatpush1.bf16.msra.mxu0 0
  %713 = vmatprep.subr.bf16.mxu0 0
  %714 = vmatpush1.bf16.msra.mxu0 0
  %715 = vmatprep.subr.bf16.mxu0 0
  %716 = vmatpush1.bf16.msra.mxu0 0
  %717 = vmatprep.subr.bf16.mxu0 0
  %718 = vmatpush1.bf16.msra.mxu0 0
  %719 = vmatprep.subr.bf16.mxu0 0
  %720 = vmatpush1.bf16.msra.mxu0 0
  %721 = vmatprep.subr.bf16.mxu0 0
  %722 = vmatpush1.bf16.msra.mxu0 0
  %723 = vmatprep.subr.bf16.mxu0 0
  %724 = vmatpush1.bf16.msra.mxu0 0
  %725 = vmatprep.subr.bf16.mxu0 0
  %726 = vmatpush1.bf16.msra.mxu0 0
  %727 = vmatprep.subr.bf16.mxu0 0
  %728 = vmatpush1.bf16.msra.mxu0 0
  %729 = vmatprep.subr.bf16.mxu0 0
  %730 = vmatpush1.bf16.msra.mxu0 0
  %731 = vmatprep.mubr.bf16.mxu0 0
  %732 = vmatmul.mubr.bf16.gmra.mrb[0].mxu0 %v697
  %v733 = vpop.f32.mrb[0].mxu0
  %v734 = vadd.f32 0.0, %v733
  %v735 = vpop.f32.mrb[0].mxu0
  %v736 = vpop.f32.mrb[0].mxu0
  %v737 = vpop.f32.mrb[0].mxu0
  %738 = vdwg.mxu0
  %v739 = vadd.f32 %v173, %v734
  %v740 = vxor.u32 %v739, 2147483648
  %v741 = vmul.f32 %v740, 1.442695
  %v742 = vpow.pop %v741
  %v743 = vadd.f32 %v742, 1.0
  %v744 = vrcp.pop %v743
  %v745 = vmul.f32 1.0, %v744
  %v746 = vtanh.pop %v739
  %v747 = vmul.f32 %v745, %v685
  %749 = vrot.lane.b32.xlu0 %v746, 32
  %v750 = vpop.permute.xlu0 %749
  %v752 = vmul.f32 %v745, %v750
  %754 = vrot.lane.b32.xlu0 %v752, 32
  %v755 = vpop.permute.xlu0 %754
  %v757 = vadd.f32 %v747, %v755
  %v758 = vtanh.pop %v757
  %760 = vrot.lane.b32.xlu0 %v758, 32
  %v761 = vpop.permute.xlu0 %760
  %v763 = vmul.f32 %v745, %v761
  %v764 = vld [vmem:[%s1] sm:$0xff]
  %v765 = vpack.c.bf16 %v764, %v764
  %v766 = vld [vmem:[%s6] sm:$0xf]
  %v767 = vld [vmem:[%s6 + $0x4] sm:$0xf]
  %v768 = vld [vmem:[%s6 + $0x8] sm:$0xf]
  %v769 = vld [vmem:[%s6 + $0xc] sm:$0xf]
  %v770 = vld [vmem:[%s7] sm:$0x1]
  %v772 = vlaneseq
  %v773 = vshrl.u32 %v772, 7
  %v774 = vsub.s32 0, %v773
  %v775 = vrot.slane %v770, %v774
  %v781 = vunpack.c.l.b16 %v766
  %v782 = vunpack.c.l.b16 %v767
  %v783 = vunpack.c.l.b16 %v768
  %v784 = vunpack.c.l.b16 %v769
  %v785 = vpack.c.b16 %v782, %v781
  %v786 = vpack.c.b16 %v784, %v783
  %v790 = vsel %vm98, %v765, 0
  %792 = vmatprep.subr.bf16.mxu0 0
  %793 = vmatpush1.bf16.msra.mxu0 %v785
  %794 = vmatprep.subr.bf16.mxu0 0
  %795 = vmatpush1.bf16.msra.mxu0 %v786
  %796 = vmatprep.subr.bf16.mxu0 0
  %797 = vmatpush1.bf16.msra.mxu0 0
  %798 = vmatprep.subr.bf16.mxu0 0
  %799 = vmatpush1.bf16.msra.mxu0 0
  %800 = vmatprep.subr.bf16.mxu0 0
  %801 = vmatpush1.bf16.msra.mxu0 0
  %802 = vmatprep.subr.bf16.mxu0 0
  %803 = vmatpush1.bf16.msra.mxu0 0
  %804 = vmatprep.subr.bf16.mxu0 0
  %805 = vmatpush1.bf16.msra.mxu0 0
  %806 = vmatprep.subr.bf16.mxu0 0
  %807 = vmatpush1.bf16.msra.mxu0 0
  %808 = vmatprep.subr.bf16.mxu0 0
  %809 = vmatpush1.bf16.msra.mxu0 0
  %810 = vmatprep.subr.bf16.mxu0 0
  %811 = vmatpush1.bf16.msra.mxu0 0
  %812 = vmatprep.subr.bf16.mxu0 0
  %813 = vmatpush1.bf16.msra.mxu0 0
  %814 = vmatprep.subr.bf16.mxu0 0
  %815 = vmatpush1.bf16.msra.mxu0 0
  %816 = vmatprep.subr.bf16.mxu0 0
  %817 = vmatpush1.bf16.msra.mxu0 0
  %818 = vmatprep.subr.bf16.mxu0 0
  %819 = vmatpush1.bf16.msra.mxu0 0
  %820 = vmatprep.subr.bf16.mxu0 0
  %821 = vmatpush1.bf16.msra.mxu0 0
  %822 = vmatprep.subr.bf16.mxu0 0
  %823 = vmatpush1.bf16.msra.mxu0 0
  %824 = vmatprep.mubr.bf16.mxu0 0
  %825 = vmatmul.mubr.bf16.gmra.mrb[0].mxu0 %v790
  %v826 = vpop.f32.mrb[0].mxu0
  %v827 = vadd.f32 %v775, %v826
  %v828 = vpop.f32.mrb[0].mxu0
  %v829 = vpop.f32.mrb[0].mxu0
  %v830 = vpop.f32.mrb[0].mxu0
  %831 = vdwg.mxu0
  %833 = vrot.lane.b32.xlu0 %v827, 64
  %v834 = vpop.permute.xlu0 %833
  %v836 = vld [vmem:[%s2] sm:$0xf]
  %v837 = vld [vmem:[%s2 + $0x4] sm:$0xf]
  %v838 = vpack.c.bf16 %v834, %v763
  %v841 = vunpack.c.l.b16 %v836
  %v842 = vunpack.c.l.b16 %v837
  %v843 = vpack.c.b16 %v842, %v841
  %845 = vrot.lane.b32.xlu0 %v838, 64
  %v846 = vpop.permute.xlu0 %845
  %vm848 = vcmask 130048
  %v850 = vsel %vm848, %v843, 0
  %852 = vmatprep.subr.bf16.mxu0 0
  %853 = vmatpush1.bf16.msra.mxu0 %v846
  %854 = vmatprep.subr.bf16.mxu0 0
  %855 = vmatpush1.bf16.msra.mxu0 0
  %856 = vmatprep.subr.bf16.mxu0 0
  %857 = vmatpush1.bf16.msra.mxu0 0
  %858 = vmatprep.subr.bf16.mxu0 0
  %859 = vmatpush1.bf16.msra.mxu0 0
  %860 = vmatprep.subr.bf16.mxu0 0
  %861 = vmatpush1.bf16.msra.mxu0 0
  %862 = vmatprep.subr.bf16.mxu0 0
  %863 = vmatpush1.bf16.msra.mxu0 0
  %864 = vmatprep.subr.bf16.mxu0 0
  %865 = vmatpush1.bf16.msra.mxu0 0
  %866 = vmatprep.subr.bf16.mxu0 0
  %867 = vmatpush1.bf16.msra.mxu0 0
  %868 = vmatprep.subr.bf16.mxu0 0
  %869 = vmatpush1.bf16.msra.mxu0 0
  %870 = vmatprep.subr.bf16.mxu0 0
  %871 = vmatpush1.bf16.msra.mxu0 0
  %872 = vmatprep.subr.bf16.mxu0 0
  %873 = vmatpush1.bf16.msra.mxu0 0
  %874 = vmatprep.subr.bf16.mxu0 0
  %875 = vmatpush1.bf16.msra.mxu0 0
  %876 = vmatprep.subr.bf16.mxu0 0
  %877 = vmatpush1.bf16.msra.mxu0 0
  %878 = vmatprep.subr.bf16.mxu0 0
  %879 = vmatpush1.bf16.msra.mxu0 0
  %880 = vmatprep.subr.bf16.mxu0 0
  %881 = vmatpush1.bf16.msra.mxu0 0
  %882 = vmatprep.subr.bf16.mxu0 0
  %883 = vmatpush1.bf16.msra.mxu0 0
  %884 = vmatprep.mubr.bf16.mxu0 0
  %885 = vmatmul.mubr.bf16.gmra.mrb[0].mxu0 %v850
  %v886 = vpop.f32.mrb[0].mxu0
  %v887 = vadd.f32 0.0, %v886
  %v888 = vpop.f32.mrb[0].mxu0
  %v889 = vpop.f32.mrb[0].mxu0
  %v890 = vadd.f32 0.0, %v889
  %v891 = vpop.f32.mrb[0].mxu0
  %892 = vdwg.mxu0
  %v893 = vpack.c.bf16 %v890, %v887
  %v894 = vld [vmem:[%s8] sm:$0xf]
  %v895 = vld [vmem:[%s8 + $0x4] sm:$0xf]
  %v896 = vld [vmem:[%s8 + $0x8] sm:$0xf]
  %v897 = vld [vmem:[%s8 + $0xc] sm:$0xf]
  %v898 = vld [vmem:[%s9] sm:$0xf]
  %v899 = vld [vmem:[%s9 + $0x4] sm:$0xf]
  %v900 = vld [vmem:[%s9 + $0x8] sm:$0xf]
  %v901 = vld [vmem:[%s9 + $0xc] sm:$0xf]
  %v906 = vunpack.c.l.b16 %v898
  %v907 = vunpack.c.l.b16 %v899
  %v908 = vunpack.c.l.b16 %v900
  %v909 = vunpack.c.l.b16 %v901
  %v910 = vpack.c.b16 %v907, %v906
  %v911 = vpack.c.b16 %v909, %v908
  %v915 = vsel %vm98, %v846, 0
  %917 = vmatprep.subr.bf16.mxu0 0
  %918 = vmatpush1.bf16.msra.mxu0 %v910
  %919 = vmatprep.subr.bf16.mxu0 0
  %920 = vmatpush1.bf16.msra.mxu0 %v911
  %921 = vmatprep.subr.bf16.mxu0 0
  %922 = vmatpush1.bf16.msra.mxu0 0
  %923 = vmatprep.subr.bf16.mxu0 0
  %924 = vmatpush1.bf16.msra.mxu0 0
  %925 = vmatprep.subr.bf16.mxu0 0
  %926 = vmatpush1.bf16.msra.mxu0 0
  %927 = vmatprep.subr.bf16.mxu0 0
  %928 = vmatpush1.bf16.msra.mxu0 0
  %929 = vmatprep.subr.bf16.mxu0 0
  %930 = vmatpush1.bf16.msra.mxu0 0
  %931 = vmatprep.subr.bf16.mxu0 0
  %932 = vmatpush1.bf16.msra.mxu0 0
  %933 = vmatprep.subr.bf16.mxu0 0
  %934 = vmatpush1.bf16.msra.mxu0 0
  %935 = vmatprep.subr.bf16.mxu0 0
  %936 = vmatpush1.bf16.msra.mxu0 0
  %937 = vmatprep.subr.bf16.mxu0 0
  %938 = vmatpush1.bf16.msra.mxu0 0
  %939 = vmatprep.subr.bf16.mxu0 0
  %940 = vmatpush1.bf16.msra.mxu0 0
  %941 = vmatprep.subr.bf16.mxu0 0
  %942 = vmatpush1.bf16.msra.mxu0 0
  %943 = vmatprep.subr.bf16.mxu0 0
  %944 = vmatpush1.bf16.msra.mxu0 0
  %945 = vmatprep.subr.bf16.mxu0 0
  %946 = vmatpush1.bf16.msra.mxu0 0
  %947 = vmatprep.subr.bf16.mxu0 0
  %948 = vmatpush1.bf16.msra.mxu0 0
  %949 = vmatprep.mubr.bf16.mxu0 0
  %950 = vmatmul.mubr.bf16.gmra.mrb[0].mxu0 %v915
  %v951 = vpop.f32.mrb[0].mxu0
  %v952 = vadd.f32 0.0, %v951
  %v953 = vpop.f32.mrb[0].mxu0
  %v954 = vpop.f32.mrb[0].mxu0
  %v955 = vadd.f32 0.0, %v954
  %v956 = vpop.f32.mrb[0].mxu0
  %957 = vdwg.mxu0
  %v962 = vunpack.c.l.b16 %v894
  %v963 = vunpack.c.l.b16 %v895
  %v964 = vunpack.c.l.b16 %v896
  %v965 = vunpack.c.l.b16 %v897
  %v966 = vpack.c.b16 %v963, %v962
  %v967 = vpack.c.b16 %v965, %v964
  %v971 = vsel %vm98, %v893, 0
  %973 = vmatprep.subr.bf16.mxu0 0
  %974 = vmatpush1.bf16.msra.mxu0 %v966
  %975 = vmatprep.subr.bf16.mxu0 0
  %976 = vmatpush1.bf16.msra.mxu0 %v967
  %977 = vmatprep.subr.bf16.mxu0 0
  %978 = vmatpush1.bf16.msra.mxu0 0
  %979 = vmatprep.subr.bf16.mxu0 0
  %980 = vmatpush1.bf16.msra.mxu0 0
  %981 = vmatprep.subr.bf16.mxu0 0
  %982 = vmatpush1.bf16.msra.mxu0 0
  %983 = vmatprep.subr.bf16.mxu0 0
  %984 = vmatpush1.bf16.msra.mxu0 0
  %985 = vmatprep.subr.bf16.mxu0 0
  %986 = vmatpush1.bf16.msra.mxu0 0
  %987 = vmatprep.subr.bf16.mxu0 0
  %988 = vmatpush1.bf16.msra.mxu0 0
  %989 = vmatprep.subr.bf16.mxu0 0
  %990 = vmatpush1.bf16.msra.mxu0 0
  %991 = vmatprep.subr.bf16.mxu0 0
  %992 = vmatpush1.bf16.msra.mxu0 0
  %993 = vmatprep.subr.bf16.mxu0 0
  %994 = vmatpush1.bf16.msra.mxu0 0
  %995 = vmatprep.subr.bf16.mxu0 0
  %996 = vmatpush1.bf16.msra.mxu0 0
  %997 = vmatprep.subr.bf16.mxu0 0
  %998 = vmatpush1.bf16.msra.mxu0 0
  %999 = vmatprep.subr.bf16.mxu0 0
  %1000 = vmatpush1.bf16.msra.mxu0 0
  %1001 = vmatprep.subr.bf16.mxu0 0
  %1002 = vmatpush1.bf16.msra.mxu0 0
  %1003 = vmatprep.subr.bf16.mxu0 0
  %1004 = vmatpush1.bf16.msra.mxu0 0
  %1005 = vmatprep.mubr.bf16.mxu0 0
  %1006 = vmatmul.mubr.bf16.gmra.mrb[0].mxu0 %v971
  %v1007 = vpop.f32.mrb[0].mxu0
  %v1008 = vadd.f32 %v952, %v1007
  %v1009 = vpop.f32.mrb[0].mxu0
  %v1010 = vpop.f32.mrb[0].mxu0
  %v1011 = vadd.f32 %v955, %v1010
  %v1012 = vpop.f32.mrb[0].mxu0
  %1013 = vdwg.mxu0
  %v1014 = vld [vmem:[%s10] sm:$0x1]
  %v1016 = vlaneseq
  %v1017 = vshrl.u32 %v1016, 7
  %v1018 = vsub.s32 0, %v1017
  %v1019 = vrot.slane %v1014, %v1018
  %v1021 = vadd.f32 %v1008, %v1019
  %v1022 = vadd.f32 %v1011, %v1019
  %v1023 = vmax.f32 %v1021, 0.0
  %v1024 = vmax.f32 %v1022, 0.0
  %v1025 = vpack.c.bf16 %v1024, %v1023
  %1026 = vmatprep.subr.bf16.mxu0 0
  %1027 = vmatpush1.bf16.msra.mxu0 %v1025
  %1028 = vmatprep.subr.bf16.mxu0 0
  %1029 = vmatpush1.bf16.msra.mxu0 0
  %1030 = vmatprep.subr.bf16.mxu0 0
  %1031 = vmatpush1.bf16.msra.mxu0 0
  %1032 = vmatprep.subr.bf16.mxu0 0
  %1033 = vmatpush1.bf16.msra.mxu0 0
  %1034 = vmatprep.subr.bf16.mxu0 0
  %1035 = vmatpush1.bf16.msra.mxu0 0
  %1036 = vmatprep.subr.bf16.mxu0 0
  %1037 = vmatpush1.bf16.msra.mxu0 0
  %1038 = vmatprep.subr.bf16.mxu0 0
  %1039 = vmatpush1.bf16.msra.mxu0 0
  %1040 = vmatprep.subr.bf16.mxu0 0
  %1041 = vmatpush1.bf16.msra.mxu0 0
  %1042 = vmatprep.subr.bf16.mxu0 0
  %1043 = vmatpush1.bf16.msra.mxu0 0
  %1044 = vmatprep.subr.bf16.mxu0 0
  %1045 = vmatpush1.bf16.msra.mxu0 0
  %1046 = vmatprep.subr.bf16.mxu0 0
  %1047 = vmatpush1.bf16.msra.mxu0 0
  %1048 = vmatprep.subr.bf16.mxu0 0
  %1049 = vmatpush1.bf16.msra.mxu0 0
  %1050 = vmatprep.subr.bf16.mxu0 0
  %1051 = vmatpush1.bf16.msra.mxu0 0
  %1052 = vmatprep.subr.bf16.mxu0 0
  %1053 = vmatpush1.bf16.msra.mxu0 0
  %1054 = vmatprep.subr.bf16.mxu0 0
  %1055 = vmatpush1.bf16.msra.mxu0 0
  %1056 = vmatprep.subr.bf16.mxu0 0
  %1057 = vmatpush1.bf16.msra.mxu0 0
  %1058 = vmatprep.mubr.bf16.mxu0 0
  %1059 = vmatmul.mubr.bf16.gmra.mrb[0].mxu0 %v850
  %v1060 = vpop.f32.mrb[0].mxu0
  %v1061 = vadd.f32 0.0, %v1060
  %v1062 = vpop.f32.mrb[0].mxu0
  %v1063 = vpop.f32.mrb[0].mxu0
  %v1064 = vadd.f32 0.0, %v1063
  %v1065 = vpop.f32.mrb[0].mxu0
  %1066 = vdwg.mxu0
  %v1067 = vpack.c.bf16 %v1064, %v1061
  %v1068 = vld [vmem:[%s11] sm:$0xf]
  %v1069 = vld [vmem:[%s11 + $0x4] sm:$0xf]
  %v1070 = vld [vmem:[%s11 + $0x8] sm:$0xf]
  %v1071 = vld [vmem:[%s11 + $0xc] sm:$0xf]
  %v1072 = vld [vmem:[%s12] sm:$0xf]
  %v1073 = vld [vmem:[%s12 + $0x4] sm:$0xf]
  %v1074 = vld [vmem:[%s12 + $0x8] sm:$0xf]
  %v1075 = vld [vmem:[%s12 + $0xc] sm:$0xf]
  %v1080 = vunpack.c.l.b16 %v1072
  %v1081 = vunpack.c.l.b16 %v1073
  %v1082 = vunpack.c.l.b16 %v1074
  %v1083 = vunpack.c.l.b16 %v1075
  %v1084 = vpack.c.b16 %v1081, %v1080
  %v1085 = vpack.c.b16 %v1083, %v1082
  %v1089 = vsel %vm98, %v1025, 0
  %1091 = vmatprep.subr.bf16.mxu0 0
  %1092 = vmatpush1.bf16.msra.mxu0 %v1084
  %1093 = vmatprep.subr.bf16.mxu0 0
  %1094 = vmatpush1.bf16.msra.mxu0 %v1085
  %1095 = vmatprep.subr.bf16.mxu0 0
  %1096 = vmatpush1.bf16.msra.mxu0 0
  %1097 = vmatprep.subr.bf16.mxu0 0
  %1098 = vmatpush1.bf16.msra.mxu0 0
  %1099 = vmatprep.subr.bf16.mxu0 0
  %1100 = vmatpush1.bf16.msra.mxu0 0
  %1101 = vmatprep.subr.bf16.mxu0 0
  %1102 = vmatpush1.bf16.msra.mxu0 0
  %1103 = vmatprep.subr.bf16.mxu0 0
  %1104 = vmatpush1.bf16.msra.mxu0 0
  %1105 = vmatprep.subr.bf16.mxu0 0
  %1106 = vmatpush1.bf16.msra.mxu0 0
  %1107 = vmatprep.subr.bf16.mxu0 0
  %1108 = vmatpush1.bf16.msra.mxu0 0
  %1109 = vmatprep.subr.bf16.mxu0 0
  %1110 = vmatpush1.bf16.msra.mxu0 0
  %1111 = vmatprep.subr.bf16.mxu0 0
  %1112 = vmatpush1.bf16.msra.mxu0 0
  %1113 = vmatprep.subr.bf16.mxu0 0
  %1114 = vmatpush1.bf16.msra.mxu0 0
  %1115 = vmatprep.subr.bf16.mxu0 0
  %1116 = vmatpush1.bf16.msra.mxu0 0
  %1117 = vmatprep.subr.bf16.mxu0 0
  %1118 = vmatpush1.bf16.msra.mxu0 0
  %1119 = vmatprep.subr.bf16.mxu0 0
  %1120 = vmatpush1.bf16.msra.mxu0 0
  %1121 = vmatprep.subr.bf16.mxu0 0
  %1122 = vmatpush1.bf16.msra.mxu0 0
  %1123 = vmatprep.mubr.bf16.mxu0 0
  %1124 = vmatmul.mubr.bf16.gmra.mrb[0].mxu0 %v1089
  %v1125 = vpop.f32.mrb[0].mxu0
  %v1126 = vadd.f32 0.0, %v1125
  %v1127 = vpop.f32.mrb[0].mxu0
  %v1128 = vpop.f32.mrb[0].mxu0
  %v1129 = vadd.f32 0.0, %v1128
  %v1130 = vpop.f32.mrb[0].mxu0
  %1131 = vdwg.mxu0
  %v1136 = vunpack.c.l.b16 %v1068
  %v1137 = vunpack.c.l.b16 %v1069
  %v1138 = vunpack.c.l.b16 %v1070
  %v1139 = vunpack.c.l.b16 %v1071
  %v1140 = vpack.c.b16 %v1137, %v1136
  %v1141 = vpack.c.b16 %v1139, %v1138
  %v1145 = vsel %vm98, %v1067, 0
  %1147 = vmatprep.subr.bf16.mxu0 0
  %1148 = vmatpush1.bf16.msra.mxu0 %v1140
  %1149 = vmatprep.subr.bf16.mxu0 0
  %1150 = vmatpush1.bf16.msra.mxu0 %v1141
  %1151 = vmatprep.subr.bf16.mxu0 0
  %1152 = vmatpush1.bf16.msra.mxu0 0
  %1153 = vmatprep.subr.bf16.mxu0 0
  %1154 = vmatpush1.bf16.msra.mxu0 0
  %1155 = vmatprep.subr.bf16.mxu0 0
  %1156 = vmatpush1.bf16.msra.mxu0 0
  %1157 = vmatprep.subr.bf16.mxu0 0
  %1158 = vmatpush1.bf16.msra.mxu0 0
  %1159 = vmatprep.subr.bf16.mxu0 0
  %1160 = vmatpush1.bf16.msra.mxu0 0
  %1161 = vmatprep.subr.bf16.mxu0 0
  %1162 = vmatpush1.bf16.msra.mxu0 0
  %1163 = vmatprep.subr.bf16.mxu0 0
  %1164 = vmatpush1.bf16.msra.mxu0 0
  %1165 = vmatprep.subr.bf16.mxu0 0
  %1166 = vmatpush1.bf16.msra.mxu0 0
  %1167 = vmatprep.subr.bf16.mxu0 0
  %1168 = vmatpush1.bf16.msra.mxu0 0
  %1169 = vmatprep.subr.bf16.mxu0 0
  %1170 = vmatpush1.bf16.msra.mxu0 0
  %1171 = vmatprep.subr.bf16.mxu0 0
  %1172 = vmatpush1.bf16.msra.mxu0 0
  %1173 = vmatprep.subr.bf16.mxu0 0
  %1174 = vmatpush1.bf16.msra.mxu0 0
  %1175 = vmatprep.subr.bf16.mxu0 0
  %1176 = vmatpush1.bf16.msra.mxu0 0
  %1177 = vmatprep.subr.bf16.mxu0 0
  %1178 = vmatpush1.bf16.msra.mxu0 0
  %1179 = vmatprep.mubr.bf16.mxu0 0
  %1180 = vmatmul.mubr.bf16.gmra.mrb[0].mxu0 %v1145
  %v1181 = vpop.f32.mrb[0].mxu0
  %v1182 = vadd.f32 %v1126, %v1181
  %v1183 = vpop.f32.mrb[0].mxu0
  %v1184 = vpop.f32.mrb[0].mxu0
  %v1185 = vadd.f32 %v1129, %v1184
  %v1186 = vpop.f32.mrb[0].mxu0
  %1187 = vdwg.mxu0
  %v1188 = vld [vmem:[%s13] sm:$0x1]
  %v1190 = vlaneseq
  %v1191 = vshrl.u32 %v1190, 7
  %v1192 = vsub.s32 0, %v1191
  %v1193 = vrot.slane %v1188, %v1192
  %v1195 = vadd.f32 %v1182, %v1193
  %v1196 = vadd.f32 %v1185, %v1193
  %v1197 = vmax.f32 %v1195, 0.0
  %v1198 = vmax.f32 %v1196, 0.0
  %v1199 = vpack.c.bf16 %v1197, %v1197
  %v1200 = vpack.c.bf16 %v1198, %v1198
  %v1201 = vld [vmem:[%s14] sm:$0xf]
  %v1202 = vld [vmem:[%s14 + $0x4] sm:$0xf]
  %v1203 = vld [vmem:[%s14 + $0x8] sm:$0xf]
  %v1204 = vld [vmem:[%s14 + $0xc] sm:$0xf]
  %v1205 = vld [vmem:[%s15] sm:$0xf]
  %v1206 = vld [vmem:[%s15 + $0x4] sm:$0xf]
  %v1207 = vld [vmem:[%s15 + $0x8] sm:$0xf]
  %v1208 = vld [vmem:[%s15 + $0xc] sm:$0xf]
  %v1213 = vunpack.c.l.b16 %v1205
  %v1214 = vunpack.c.l.b16 %v1206
  %v1215 = vunpack.c.l.b16 %v1207
  %v1216 = vunpack.c.l.b16 %v1208
  %v1217 = vpack.c.b16 %v1214, %v1213
  %v1218 = vpack.c.b16 %v1216, %v1215
  %v1222 = vsel %vm98, %v1200, 0
  %1224 = vmatprep.subr.bf16.mxu0 0
  %1225 = vmatpush1.bf16.msra.mxu0 %v1217
  %1226 = vmatprep.subr.bf16.mxu0 0
  %1227 = vmatpush1.bf16.msra.mxu0 %v1218
  %1228 = vmatprep.subr.bf16.mxu0 0
  %1229 = vmatpush1.bf16.msra.mxu0 0
  %1230 = vmatprep.subr.bf16.mxu0 0
  %1231 = vmatpush1.bf16.msra.mxu0 0
  %1232 = vmatprep.subr.bf16.mxu0 0
  %1233 = vmatpush1.bf16.msra.mxu0 0
  %1234 = vmatprep.subr.bf16.mxu0 0
  %1235 = vmatpush1.bf16.msra.mxu0 0
  %1236 = vmatprep.subr.bf16.mxu0 0
  %1237 = vmatpush1.bf16.msra.mxu0 0
  %1238 = vmatprep.subr.bf16.mxu0 0
  %1239 = vmatpush1.bf16.msra.mxu0 0
  %1240 = vmatprep.subr.bf16.mxu0 0
  %1241 = vmatpush1.bf16.msra.mxu0 0
  %1242 = vmatprep.subr.bf16.mxu0 0
  %1243 = vmatpush1.bf16.msra.mxu0 0
  %1244 = vmatprep.subr.bf16.mxu0 0
  %1245 = vmatpush1.bf16.msra.mxu0 0
  %1246 = vmatprep.subr.bf16.mxu0 0
  %1247 = vmatpush1.bf16.msra.mxu0 0
  %1248 = vmatprep.subr.bf16.mxu0 0
  %1249 = vmatpush1.bf16.msra.mxu0 0
  %1250 = vmatprep.subr.bf16.mxu0 0
  %1251 = vmatpush1.bf16.msra.mxu0 0
  %1252 = vmatprep.subr.bf16.mxu0 0
  %1253 = vmatpush1.bf16.msra.mxu0 0
  %1254 = vmatprep.subr.bf16.mxu0 0
  %1255 = vmatpush1.bf16.msra.mxu0 0
  %1256 = vmatprep.mubr.bf16.mxu0 0
  %1257 = vmatmul.mubr.bf16.gmra.mrb[0].mxu0 %v1222
  %v1258 = vpop.f32.mrb[0].mxu0
  %v1259 = vadd.f32 0.0, %v1258
  %v1260 = vpop.f32.mrb[0].mxu0
  %v1261 = vpop.f32.mrb[0].mxu0
  %v1262 = vpop.f32.mrb[0].mxu0
  %1263 = vdwg.mxu0
  %v1268 = vunpack.c.l.b16 %v1201
  %v1269 = vunpack.c.l.b16 %v1202
  %v1270 = vunpack.c.l.b16 %v1203
  %v1271 = vunpack.c.l.b16 %v1204
  %v1272 = vpack.c.b16 %v1269, %v1268
  %v1273 = vpack.c.b16 %v1271, %v1270
  %v1277 = vsel %vm98, %v1199, 0
  %1279 = vmatprep.subr.bf16.mxu0 0
  %1280 = vmatpush1.bf16.msra.mxu0 %v1272
  %1281 = vmatprep.subr.bf16.mxu0 0
  %1282 = vmatpush1.bf16.msra.mxu0 %v1273
  %1283 = vmatprep.subr.bf16.mxu0 0
  %1284 = vmatpush1.bf16.msra.mxu0 0
  %1285 = vmatprep.subr.bf16.mxu0 0
  %1286 = vmatpush1.bf16.msra.mxu0 0
  %1287 = vmatprep.subr.bf16.mxu0 0
  %1288 = vmatpush1.bf16.msra.mxu0 0
  %1289 = vmatprep.subr.bf16.mxu0 0
  %1290 = vmatpush1.bf16.msra.mxu0 0
  %1291 = vmatprep.subr.bf16.mxu0 0
  %1292 = vmatpush1.bf16.msra.mxu0 0
  %1293 = vmatprep.subr.bf16.mxu0 0
  %1294 = vmatpush1.bf16.msra.mxu0 0
  %1295 = vmatprep.subr.bf16.mxu0 0
  %1296 = vmatpush1.bf16.msra.mxu0 0
  %1297 = vmatprep.subr.bf16.mxu0 0
  %1298 = vmatpush1.bf16.msra.mxu0 0
  %1299 = vmatprep.subr.bf16.mxu0 0
  %1300 = vmatpush1.bf16.msra.mxu0 0
  %1301 = vmatprep.subr.bf16.mxu0 0
  %1302 = vmatpush1.bf16.msra.mxu0 0
  %1303 = vmatprep.subr.bf16.mxu0 0
  %1304 = vmatpush1.bf16.msra.mxu0 0
  %1305 = vmatprep.subr.bf16.mxu0 0
  %1306 = vmatpush1.bf16.msra.mxu0 0
  %1307 = vmatprep.subr.bf16.mxu0 0
  %1308 = vmatpush1.bf16.msra.mxu0 0
  %1309 = vmatprep.subr.bf16.mxu0 0
  %1310 = vmatpush1.bf16.msra.mxu0 0
  %1311 = vmatprep.mubr.bf16.mxu0 0
  %1312 = vmatmul.mubr.bf16.gmra.mrb[0].mxu0 %v1277
  %v1313 = vpop.f32.mrb[0].mxu0
  %v1314 = vadd.f32 %v1259, %v1313
  %v1315 = vpop.f32.mrb[0].mxu0
  %v1316 = vpop.f32.mrb[0].mxu0
  %v1317 = vpop.f32.mrb[0].mxu0
  %1318 = vdwg.mxu0
  %v1319 = vld [vmem:[%s16] sm:$0x1]
  %v1321 = vlaneseq
  %v1322 = vshrl.u32 %v1321, 7
  %v1323 = vsub.s32 0, %v1322
  %v1324 = vrot.slane %v1319, %v1323
  %v1326 = vadd.f32 %v1314, %v1324
  %v1327 = vmax.f32 %v1326, 0.0
  %v1328 = vpack.c.bf16 %v1327, %v1327
  %v1329 = vld [vmem:[%s17] sm:$0xf]
  %v1330 = vld [vmem:[%s17 + $0x4] sm:$0xf]
  %v1331 = vld [vmem:[%s17 + $0x8] sm:$0xf]
  %v1332 = vld [vmem:[%s17 + $0xc] sm:$0xf]
  %v1333 = vld [vmem:[%s18] sm:$0x1]
  %v1335 = vlaneseq
  %v1336 = vshrl.u32 %v1335, 7
  %v1337 = vsub.s32 0, %v1336
  %v1338 = vrot.slane %v1333, %v1337
  %v1344 = vunpack.c.l.b16 %v1329
  %v1345 = vunpack.c.l.b16 %v1330
  %v1346 = vunpack.c.l.b16 %v1331
  %v1347 = vunpack.c.l.b16 %v1332
  %v1348 = vpack.c.b16 %v1345, %v1344
  %v1349 = vpack.c.b16 %v1347, %v1346
  %v1353 = vsel %vm98, %v1328, 0
  %1355 = vmatprep.subr.bf16.mxu0 0
  %1356 = vmatpush1.bf16.msra.mxu0 %v1348
  %1357 = vmatprep.subr.bf16.mxu0 0
  %1358 = vmatpush1.bf16.msra.mxu0 %v1349
  %1359 = vmatprep.subr.bf16.mxu0 0
  %1360 = vmatpush1.bf16.msra.mxu0 0
  %1361 = vmatprep.subr.bf16.mxu0 0
  %1362 = vmatpush1.bf16.msra.mxu0 0
  %1363 = vmatprep.subr.bf16.mxu0 0
  %1364 = vmatpush1.bf16.msra.mxu0 0
  %1365 = vmatprep.subr.bf16.mxu0 0
  %1366 = vmatpush1.bf16.msra.mxu0 0
  %1367 = vmatprep.subr.bf16.mxu0 0
  %1368 = vmatpush1.bf16.msra.mxu0 0
  %1369 = vmatprep.subr.bf16.mxu0 0
  %1370 = vmatpush1.bf16.msra.mxu0 0
  %1371 = vmatprep.subr.bf16.mxu0 0
  %1372 = vmatpush1.bf16.msra.mxu0 0
  %1373 = vmatprep.subr.bf16.mxu0 0
  %1374 = vmatpush1.bf16.msra.mxu0 0
  %1375 = vmatprep.subr.bf16.mxu0 0
  %1376 = vmatpush1.bf16.msra.mxu0 0
  %1377 = vmatprep.subr.bf16.mxu0 0
  %1378 = vmatpush1.bf16.msra.mxu0 0
  %1379 = vmatprep.subr.bf16.mxu0 0
  %1380 = vmatpush1.bf16.msra.mxu0 0
  %1381 = vmatprep.subr.bf16.mxu0 0
  %1382 = vmatpush1.bf16.msra.mxu0 0
  %1383 = vmatprep.subr.bf16.mxu0 0
  %1384 = vmatpush1.bf16.msra.mxu0 0
  %1385 = vmatprep.subr.bf16.mxu0 0
  %1386 = vmatpush1.bf16.msra.mxu0 0
  %1387 = vmatprep.mubr.bf16.mxu0 0
  %1388 = vmatmul.mubr.bf16.gmra.mrb[0].mxu0 %v1353
  %v1389 = vpop.f32.mrb[0].mxu0
  %v1390 = vadd.f32 %v1338, %v1389
  %v1391 = vpop.f32.mrb[0].mxu0
  %v1392 = vpop.f32.mrb[0].mxu0
  %v1393 = vpop.f32.mrb[0].mxu0
  %1394 = vdwg.mxu0
  %v1395 = vxor.u32 %v1390, 2147483648
  %v1396 = vmul.f32 %v1395, 1.442695
  %v1397 = vpow.pop %v1396
  %v1398 = vadd.f32 %v1397, 1.0
  %v1399 = vrcp.pop %v1398
  %v1400 = vmul.f32 1.0, %v1399
  %1401 = vst [vmem:[%s19] sm:$0xff] %v1400
  // Predicated region
  $region78: #{gnn_recommender_forward.1} parent=0 // pred_check
    _
  $region79: #{gnn_recommender_forward.1} parent=0 // pred_check_branch
    %1403 = sbr.rel (0) target = $region81
  $region80: #{gnn_recommender_forward.1} parent=0 // pred_region
    _
  $region81: #{gnn_recommender_forward.1} parent=0 // pred_fallthru
    _
  // Predicated region
  $region82: #{gnn_recommender_forward.1} parent=0 // pred_check
    _
  $region83: #{gnn_recommender_forward.1} parent=0 // pred_check_branch
    %1405 = sbr.rel (0) target = $region85
  $region84: #{gnn_recommender_forward.1} parent=0 // pred_region
    _
  $region85: #{gnn_recommender_forward.1} parent=0 // pred_fallthru
    _

</llo_original>
